<compile_context>
chip_gen: v7x
topology: tpu7x:2x2x1
jax: 0.10.0
libtpu: 0.0.40
codegen_flags: <defaults>
</compile_context>

<pallas_src>
import jax
import jax.numpy as jnp
from jax.experimental import pallas as pl
from jax.experimental.pallas import tpu as pltpu


# ----------------------------------------------------------------------------
# Best-effort hardware probes (guarded; never raise).
# ----------------------------------------------------------------------------
def _vmem_capacity_bytes():
    try:
        return int(pltpu.get_tpu_info().vmem_capacity_bytes)
    except Exception:
        return 64 << 20  # conservative default (v7x-sized VMEM)


def _tensorcores_per_chip():
    """v4 / v5p / v7x have 2 TensorCores per chip; v5e / v6e have 1."""
    try:
        kind = jax.devices()[0].device_kind.lower()
    except Exception:
        return 1
    return 2 if any(t in kind for t in ("v7", "v5p", "v4")) else 1


# ----------------------------------------------------------------------------
# Tiling decision + int8 per-output-channel weight quantization.
# ----------------------------------------------------------------------------
def _pick_tile_n(N, K, w_itemsize, vmem_cap):
    """Largest power-of-two multiple of 128 dividing N whose (K, tn) weight slab
    fits ~22% of physical VMEM, so the double-buffered weight stream stays well
    inside VMEM on every generation."""
    budget = max(8 << 20, int(vmem_cap * 0.22))
    if N % 128 != 0:
        return N
    tn, best = 128, 128
    while tn <= N:
        if N % tn == 0 and K * tn * w_itemsize <= budget:
            best = tn
        tn *= 2
    return best


def quantize_linear(w_f32, b_f32, tn):
    """Symmetric per-output-channel int8 quantization of a (K, N) weight.

    Returns:
      w_q_blocked: (N//tn, K, tn) int8  -- pre-blocked so each N-tile DMA is one
                                           fully contiguous HBM read.
      scale:       (1, N) float32       -- per-output-channel dequant scale.
      bias:        (1, N) float32
    """
    K, N = w_f32.shape
    assert N % tn == 0
    scale = jnp.maximum(jnp.max(jnp.abs(w_f32), axis=0, keepdims=True), 1e-8) / 127.0
    q = jnp.clip(jnp.round(w_f32 / scale), -127.0, 127.0).astype(jnp.int8)
    q_blocked = jnp.transpose(q.reshape(K, N // tn, tn), (1, 0, 2))
    return q_blocked, scale.astype(jnp.float32), b_f32.reshape(1, N).astype(jnp.float32)


# ----------------------------------------------------------------------------
# Per-layer kernel: y = relu((x @ dequant(Wq)) * scale + b), 1-D grid over N.
# Megacore-safe ("parallel" N axis) -> used on 2-TensorCore chips.
# ----------------------------------------------------------------------------
def _linear_relu_kernel(x_ref, w_ref, s_ref, b_ref, o_ref):
    w = w_ref[...].astype(jnp.bfloat16)                  # int8 -> bf16 (exact)
    acc = jnp.dot(x_ref[...], w, preferred_element_type=jnp.float32)
    y = acc * s_ref[...] + b_ref[...]                    # per-channel scale + bias
    o_ref[...] = jnp.maximum(y, 0.0).astype(o_ref.dtype)


def linear_relu(x_bf16, w_q_blocked, scale, bias, *, out_dtype=jnp.bfloat16):
    M, K = x_bf16.shape
    nb, Kw, tn = w_q_blocked.shape
    N = nb * tn
    assert K == Kw

    cap = _vmem_capacity_bytes()
    out_bytes = jnp.dtype(out_dtype).itemsize
    needed = (2 * M * K * 2 + 2 * K * tn + 2 * M * tn * out_bytes
              + 8 * tn * 4 + (4 << 20))
    vmem_limit = min(max(needed, 32 << 20), int(cap * 0.85))

    cost = pl.CostEstimate(
        flops=2 * M * N * K,
        transcendentals=0,
        bytes_accessed=K * N + M * K * 2 + M * N * out_bytes + 2 * N * 4,
    )

    return pl.pallas_call(
        _linear_relu_kernel,
        out_shape=jax.ShapeDtypeStruct((M, N), out_dtype),
        grid_spec=pltpu.PrefetchScalarGridSpec(
            num_scalar_prefetch=0,
            grid=(nb,),                                          # 1-D grid: N tiles
            in_specs=[
                pl.BlockSpec((M, K), lambda j: (0, 0)),          # x: resident row slab
                pl.BlockSpec((None, K, tn), lambda j: (j, 0, 0)),  # contiguous weight tile
                pl.BlockSpec((1, tn), lambda j: (0, j)),         # scale slice
                pl.BlockSpec((1, tn), lambda j: (0, j)),         # bias slice
            ],
            out_specs=pl.BlockSpec((M, tn), lambda j: (0, j)),
        ),
        compiler_params=pltpu.CompilerParams(
            dimension_semantics=("parallel",),      # megacore splits the weight stream
            vmem_limit_bytes=vmem_limit,
        ),
        cost_estimate=cost,
    )(x_bf16, w_q_blocked, scale, bias)


# ----------------------------------------------------------------------------
# Fused 3-layer kernel: one pallas_call, grid = (layer, N-tile), activations
# kept in a VMEM scratch (no intermediate HBM round-trips, no extra launches).
# Private scratch => both axes "arbitrary"; used on single-TensorCore chips.
# ----------------------------------------------------------------------------
def _make_fused_net_kernel(nb, tn):
    def kernel(x_ref, w_ref, s_ref, b_ref, o_ref, act_ref):
        l = pl.program_id(0)

        w = w_ref[...].astype(jnp.bfloat16)          # (K, tn) dequantized weight tile

        def epilogue(acc):
            return jnp.maximum(acc * s_ref[...] + b_ref[...], 0.0)

        def dot_from_scratch(slot):
            # Activations are stored as nb column-blocks of (M, tn); those blocks
            # are exactly the K-blocks of this layer's input -> block-wise dots.
            acc = jnp.zeros((x_ref.shape[0], tn), jnp.float32)
            for kb in range(nb):
                acc += jnp.dot(act_ref[slot, kb], w[kb * tn:(kb + 1) * tn, :],
                               preferred_element_type=jnp.float32)
            return acc

        j = pl.program_id(1)

        @pl.when(l == 0)
        def _():
            acc = jnp.dot(x_ref[...], w, preferred_element_type=jnp.float32)
            act_ref[0, j] = epilogue(acc).astype(act_ref.dtype)

        @pl.when(l == 1)
        def _():
            act_ref[1, j] = epilogue(dot_from_scratch(0)).astype(act_ref.dtype)

        @pl.when(l == 2)
        def _():
            o_ref[...] = epilogue(dot_from_scratch(1)).astype(o_ref.dtype)

    return kernel


def fused_net(x_bf16, w_all, s_all, b_all, *, out_dtype=jnp.float32):
    M, K = x_bf16.shape
    L, nb, Kw, tn = w_all.shape
    N = nb * tn
    assert L == 3 and Kw == K and N == K, "fused path expects three square layers"

    cap = _vmem_capacity_bytes()
    out_bytes = jnp.dtype(out_dtype).itemsize
    needed = (2 * M * K * 2                      # resident x (double-buffer slack)
              + 2 * 2 * nb * 8 * tn * 2          # activation scratch (sublane-padded)
              + 2 * K * tn                       # double-buffered int8 weight tiles
              + 2 * M * tn * out_bytes + 16 * tn * 4 + (4 << 20))
    vmem_limit = min(max(needed, 32 << 20), int(cap * 0.85))

    cost = pl.CostEstimate(
        flops=2 * L * M * N * K,
        transcendentals=0,
        bytes_accessed=L * K * N + M * K * 2 + M * N * out_bytes + 2 * L * N * 4,
    )

    return pl.pallas_call(
        _make_fused_net_kernel(nb, tn),
        out_shape=jax.ShapeDtypeStruct((M, N), out_dtype),
        grid_spec=pltpu.PrefetchScalarGridSpec(
            num_scalar_prefetch=0,
            grid=(L, nb),                                     # layer outer, N-tile inner
            in_specs=[
                pl.BlockSpec((M, K), lambda l, j: (0, 0)),
                pl.BlockSpec((None, None, K, tn), lambda l, j: (l, j, 0, 0)),
                pl.BlockSpec((None, 1, tn), lambda l, j: (l, 0, j)),
                pl.BlockSpec((None, 1, tn), lambda l, j: (l, 0, j)),
            ],
            out_specs=pl.BlockSpec((M, tn), lambda l, j: (0, j)),
            scratch_shapes=[pltpu.VMEM((2, nb, M, tn), jnp.bfloat16)],
        ),
        compiler_params=pltpu.CompilerParams(
            dimension_semantics=("arbitrary", "arbitrary"),
            vmem_limit_bytes=vmem_limit,
        ),
        cost_estimate=cost,
    )(x_bf16, w_all, s_all, b_all)


# ----------------------------------------------------------------------------
# Parameters / forward / references
# ----------------------------------------------------------------------------
def init_net_params(key, d, n_layers=3):
    """PyTorch nn.Linear default init U(-1/sqrt(in), 1/sqrt(in)), W transposed."""
    params = []
    bound = 1.0 / (d ** 0.5)
    for _ in range(n_layers):
        key, kw, kb = jax.random.split(key, 3)
        w = jax.random.uniform(kw, (d, d), jnp.float32, -bound, bound)
        b = jax.random.uniform(kb, (d,), jnp.float32, -bound, bound)
        params.append((w, b))
    return params


def pack_net_params(f32_params, tn):
    return [quantize_linear(w, b, tn) for (w, b) in f32_params]


def net_forward(x, packed):
    """fc1 -> relu -> fc2 -> relu -> fc3 -> relu (int8 weights, bf16 activations)."""
    x_bf16 = x.astype(jnp.bfloat16)
    if _tensorcores_per_chip() == 1 and len(packed) == 3:
        # One-time stacking cost in practice (done at parameter-load time).
        w_all = jnp.stack([w for (w, _, _) in packed])
        s_all = jnp.stack([s for (_, s, _) in packed])
        b_all = jnp.stack([b for (_, _, b) in packed])
        return fused_net(x_bf16, w_all, s_all, b_all, out_dtype=jnp.float32)
    h = x_bf16
    for i, (wq, s, b) in enumerate(packed):
        last = i == len(packed) - 1
        h = linear_relu(h, wq, s, b, out_dtype=jnp.float32 if last else jnp.bfloat16)
    return h


def ref_forward_quantized(x, packed):
    """Plain-JAX mirror of the kernel math (int8 weights, bf16 activations)."""
    h = x.astype(jnp.bfloat16)
    n = len(packed)
    for i, (wq_blocked, s, b) in enumerate(packed):
        nb, K, tn = wq_blocked.shape
        wq = jnp.transpose(wq_blocked, (1, 0, 2)).reshape(K, nb * tn)
        acc = jnp.dot(h, wq.astype(jnp.bfloat16), preferred_element_type=jnp.float32)
        y = jnp.maximum(acc * s + b, 0.0)
        h = y.astype(jnp.float32 if i == n - 1 else jnp.bfloat16)
    return h


def ref_forward_f32(x, f32_params):
    """True full-precision forward of the original module."""
    h = x
    for (w, b) in f32_params:
        h = jnp.maximum(h @ w + b, 0.0)
    return h


if __name__ == "__main__":
    # Small shape consistent with the module: batch=4 (as in the PyTorch script),
    # hidden D=512.  (The original module uses D = 768*4*4 = 12288.)
    B, D = 4, 512

    key = jax.random.PRNGKey(0)
    key, kx = jax.random.split(key)
    x = jax.random.normal(kx, (B, D), dtype=jnp.float32)

    f32_params = init_net_params(key, D)
    tn = _pick_tile_n(D, D, 1, _vmem_capacity_bytes())
    packed = pack_net_params(f32_params, tn)

    # Path auto-selected for this chip generation.
    out = jax.block_until_ready(net_forward(x, packed))

    # Exercise + validate both code paths explicitly.
    w_all = jnp.stack([w for (w, _, _) in packed])
    s_all = jnp.stack([s for (_, s, _) in packed])
    b_all = jnp.stack([b for (_, _, b) in packed])
    out_fused = jax.block_until_ready(
        fused_net(x.astype(jnp.bfloat16), w_all, s_all, b_all))

    h = x.astype(jnp.bfloat16)
    for i, (wq, s, b) in enumerate(packed):
        h = linear_relu(h, wq, s, b,
                        out_dtype=jnp.float32 if i == len(packed) - 1 else jnp.bfloat16)
    out_layered = jax.block_until_ready(h)

    ref_q = ref_forward_quantized(x, packed)   # same quantized math
    ref_f = ref_forward_f32(x, f32_params)     # true f32 module

    for o in (out, out_fused, out_layered):
        assert o.shape == (B, D) and o.dtype == jnp.float32
        assert jnp.allclose(o, ref_q, atol=1e-2, rtol=1e-2)
        rel = float(jnp.linalg.norm(o - ref_f) / (jnp.linalg.norm(ref_f) + 1e-12))
        assert rel < 0.05, f"quantization error too large: {rel}"

    print("KERNEL_OK")
</pallas_src>

<mosaic_0001>
module attributes {stable_mosaic.version = 11 : i64} {
  func.func @kernel(%arg0: i32, %arg1: i32, %arg2: memref<4x512xbf16, #tpu.memory_space<vmem>>, %arg3: memref<1x1x512x512xi8, #tpu.memory_space<vmem>>, %arg4: memref<1x1x512xf32, #tpu.memory_space<vmem>>, %arg5: memref<1x1x512xf32, #tpu.memory_space<vmem>>, %arg6: memref<4x512xf32, #tpu.memory_space<vmem>>, %arg7: memref<2x1x4x512xbf16, #tpu.memory_space<vmem>>) attributes {dimension_semantics = [#tpu.dimension_semantics<arbitrary>, #tpu.dimension_semantics<arbitrary>], iteration_bounds = array<i64: 3, 1>, scalar_prefetch = 0 : i64, scratch_operands = 1 : i64, tpu.core_type = #tpu.core_type<tc>, window_params = [{pipeline_mode = #tpu.pipeline_mode<synchronous>, transform_indices = @transform_0, window_bounds = array<i64: 4, 512>}, {transform_indices = @transform_1, window_bounds = array<i64: 1, 1, 512, 512>}, {transform_indices = @transform_2, window_bounds = array<i64: 1, 1, 512>}, {transform_indices = @transform_3, window_bounds = array<i64: 1, 1, 512>}, {transform_indices = @transform_4, window_bounds = array<i64: 4, 512>}]} {
    %c0 = arith.constant 0 : index
    %c0_0 = arith.constant 0 : index
    %c0_1 = arith.constant 0 : index
    %c0_2 = arith.constant 0 : index
    %0 = vector.load %arg3[%c0, %c0_0, %c0_1, %c0_2] : memref<1x1x512x512xi8, #tpu.memory_space<vmem>>, vector<1x1x512x512xi8>
    %1 = vector.shape_cast %0 : vector<1x1x512x512xi8> to vector<512x512xi8>
    %2 = arith.sitofp %1 : vector<512x512xi8> to vector<512x512xbf16>
    %c0_i32 = arith.constant 0 : i32
    %3 = arith.cmpi eq, %arg0, %c0_i32 : i32
    %4 = arith.extui %3 : i1 to i32
    %c0_i32_3 = arith.constant 0 : i32
    %5 = arith.cmpi ne, %4, %c0_i32_3 : i32
    scf.if %5 {
      %c0_6 = arith.constant 0 : index
      %c0_7 = arith.constant 0 : index
      %12 = vector.load %arg2[%c0_6, %c0_7] : memref<4x512xbf16, #tpu.memory_space<vmem>>, vector<4x512xbf16>
      %cst = arith.constant dense<0.000000e+00> : vector<4x512xf32>
      %13 = tpu.matmul %12, %2, %cst {dimension_numbers = #tpu.dot_dimension_numbers<[1], [0], [0], [1], [0, 0, 1, 1], [], []>} : vector<4x512xbf16>, vector<512x512xbf16>, vector<4x512xf32> -> vector<4x512xf32>
      %c0_8 = arith.constant 0 : index
      %c0_9 = arith.constant 0 : index
      %c0_10 = arith.constant 0 : index
      %14 = vector.load %arg4[%c0_8, %c0_9, %c0_10] : memref<1x1x512xf32, #tpu.memory_space<vmem>>, vector<1x1x512xf32>
      %15 = vector.shape_cast %14 : vector<1x1x512xf32> to vector<1x512xf32>
      %16 = vector.broadcast %15 : vector<1x512xf32> to vector<4x512xf32>
      %17 = arith.mulf %13, %16 : vector<4x512xf32>
      %c0_11 = arith.constant 0 : index
      %c0_12 = arith.constant 0 : index
      %c0_13 = arith.constant 0 : index
      %18 = vector.load %arg5[%c0_11, %c0_12, %c0_13] : memref<1x1x512xf32, #tpu.memory_space<vmem>>, vector<1x1x512xf32>
      %19 = vector.shape_cast %18 : vector<1x1x512xf32> to vector<1x512xf32>
      %20 = vector.broadcast %19 : vector<1x512xf32> to vector<4x512xf32>
      %21 = arith.addf %17, %20 : vector<4x512xf32>
      %cst_14 = arith.constant 0.000000e+00 : f32
      %22 = vector.broadcast %cst_14 : f32 to vector<4x512xf32>
      %23 = arith.maximumf %21, %22 : vector<4x512xf32>
      %24 = arith.truncf %23 : vector<4x512xf32> to vector<4x512xbf16>
      %c0_15 = arith.constant 0 : index
      %25 = arith.index_cast %arg1 : i32 to index
      %c0_16 = arith.constant 0 : index
      %c0_17 = arith.constant 0 : index
      %26 = vector.load %arg7[%c0_15, %25, %c0_16, %c0_17] : memref<2x1x4x512xbf16, #tpu.memory_space<vmem>>, vector<1x1x4x512xbf16>
      %27 = vector.shape_cast %26 : vector<1x1x4x512xbf16> to vector<4x512xbf16>
      %28 = vector.shape_cast %24 : vector<4x512xbf16> to vector<1x1x4x512xbf16>
      tpu.vector_store %arg7[%c0_15, %25, %c0_16, %c0_17], %28 {strides = array<i32>} : memref<2x1x4x512xbf16, #tpu.memory_space<vmem>>, vector<1x1x4x512xbf16>,
    } else {
    }
    %c1_i32 = arith.constant 1 : i32
    %6 = arith.cmpi eq, %arg0, %c1_i32 : i32
    %7 = arith.extui %6 : i1 to i32
    %c0_i32_4 = arith.constant 0 : i32
    %8 = arith.cmpi ne, %7, %c0_i32_4 : i32
    scf.if %8 {
      %cst = arith.constant 0.000000e+00 : f32
      %12 = vector.broadcast %cst : f32 to vector<4x512xf32>
      %c0_6 = arith.constant 0 : index
      %c0_7 = arith.constant 0 : index
      %c0_8 = arith.constant 0 : index
      %c0_9 = arith.constant 0 : index
      %13 = vector.load %arg7[%c0_6, %c0_7, %c0_8, %c0_9] : memref<2x1x4x512xbf16, #tpu.memory_space<vmem>>, vector<1x1x4x512xbf16>
      %14 = vector.shape_cast %13 : vector<1x1x4x512xbf16> to vector<4x512xbf16>
      %cst_10 = arith.constant dense<0.000000e+00> : vector<4x512xf32>
      %15 = tpu.matmul %14, %2, %cst_10 {dimension_numbers = #tpu.dot_dimension_numbers<[1], [0], [0], [1], [0, 0, 1, 1], [], []>} : vector<4x512xbf16>, vector<512x512xbf16>, vector<4x512xf32> -> vector<4x512xf32>
      %16 = arith.addf %12, %15 : vector<4x512xf32>
      %c0_11 = arith.constant 0 : index
      %c0_12 = arith.constant 0 : index
      %c0_13 = arith.constant 0 : index
      %17 = vector.load %arg4[%c0_11, %c0_12, %c0_13] : memref<1x1x512xf32, #tpu.memory_space<vmem>>, vector<1x1x512xf32>
      %18 = vector.shape_cast %17 : vector<1x1x512xf32> to vector<1x512xf32>
      %19 = vector.broadcast %18 : vector<1x512xf32> to vector<4x512xf32>
      %20 = arith.mulf %16, %19 : vector<4x512xf32>
      %c0_14 = arith.constant 0 : index
      %c0_15 = arith.constant 0 : index
      %c0_16 = arith.constant 0 : index
      %21 = vector.load %arg5[%c0_14, %c0_15, %c0_16] : memref<1x1x512xf32, #tpu.memory_space<vmem>>, vector<1x1x512xf32>
      %22 = vector.shape_cast %21 : vector<1x1x512xf32> to vector<1x512xf32>
      %23 = vector.broadcast %22 : vector<1x512xf32> to vector<4x512xf32>
      %24 = arith.addf %20, %23 : vector<4x512xf32>
      %cst_17 = arith.constant 0.000000e+00 : f32
      %25 = vector.broadcast %cst_17 : f32 to vector<4x512xf32>
      %26 = arith.maximumf %24, %25 : vector<4x512xf32>
      %27 = arith.truncf %26 : vector<4x512xf32> to vector<4x512xbf16>
      %c1 = arith.constant 1 : index
      %28 = arith.index_cast %arg1 : i32 to index
      %c0_18 = arith.constant 0 : index
      %c0_19 = arith.constant 0 : index
      %29 = vector.load %arg7[%c1, %28, %c0_18, %c0_19] : memref<2x1x4x512xbf16, #tpu.memory_space<vmem>>, vector<1x1x4x512xbf16>
      %30 = vector.shape_cast %29 : vector<1x1x4x512xbf16> to vector<4x512xbf16>
      %31 = vector.shape_cast %27 : vector<4x512xbf16> to vector<1x1x4x512xbf16>
      tpu.vector_store %arg7[%c1, %28, %c0_18, %c0_19], %31 {strides = array<i32>} : memref<2x1x4x512xbf16, #tpu.memory_space<vmem>>, vector<1x1x4x512xbf16>,
    } else {
    }
    %c2_i32 = arith.constant 2 : i32
    %9 = arith.cmpi eq, %arg0, %c2_i32 : i32
    %10 = arith.extui %9 : i1 to i32
    %c0_i32_5 = arith.constant 0 : i32
    %11 = arith.cmpi ne, %10, %c0_i32_5 : i32
    scf.if %11 {
      %cst = arith.constant 0.000000e+00 : f32
      %12 = vector.broadcast %cst : f32 to vector<4x512xf32>
      %c1 = arith.constant 1 : index
      %c0_6 = arith.constant 0 : index
      %c0_7 = arith.constant 0 : index
      %c0_8 = arith.constant 0 : index
      %13 = vector.load %arg7[%c1, %c0_6, %c0_7, %c0_8] : memref<2x1x4x512xbf16, #tpu.memory_space<vmem>>, vector<1x1x4x512xbf16>
      %14 = vector.shape_cast %13 : vector<1x1x4x512xbf16> to vector<4x512xbf16>
      %cst_9 = arith.constant dense<0.000000e+00> : vector<4x512xf32>
      %15 = tpu.matmul %14, %2, %cst_9 {dimension_numbers = #tpu.dot_dimension_numbers<[1], [0], [0], [1], [0, 0, 1, 1], [], []>} : vector<4x512xbf16>, vector<512x512xbf16>, vector<4x512xf32> -> vector<4x512xf32>
      %16 = arith.addf %12, %15 : vector<4x512xf32>
      %c0_10 = arith.constant 0 : index
      %c0_11 = arith.constant 0 : index
      %c0_12 = arith.constant 0 : index
      %17 = vector.load %arg4[%c0_10, %c0_11, %c0_12] : memref<1x1x512xf32, #tpu.memory_space<vmem>>, vector<1x1x512xf32>
      %18 = vector.shape_cast %17 : vector<1x1x512xf32> to vector<1x512xf32>
      %19 = vector.broadcast %18 : vector<1x512xf32> to vector<4x512xf32>
      %20 = arith.mulf %16, %19 : vector<4x512xf32>
      %c0_13 = arith.constant 0 : index
      %c0_14 = arith.constant 0 : index
      %c0_15 = arith.constant 0 : index
      %21 = vector.load %arg5[%c0_13, %c0_14, %c0_15] : memref<1x1x512xf32, #tpu.memory_space<vmem>>, vector<1x1x512xf32>
      %22 = vector.shape_cast %21 : vector<1x1x512xf32> to vector<1x512xf32>
      %23 = vector.broadcast %22 : vector<1x512xf32> to vector<4x512xf32>
      %24 = arith.addf %20, %23 : vector<4x512xf32>
      %cst_16 = arith.constant 0.000000e+00 : f32
      %25 = vector.broadcast %cst_16 : f32 to vector<4x512xf32>
      %26 = arith.maximumf %24, %25 : vector<4x512xf32>
      %c0_17 = arith.constant 0 : index
      %c0_18 = arith.constant 0 : index
      %27 = vector.load %arg6[%c0_17, %c0_18] : memref<4x512xf32, #tpu.memory_space<vmem>>, vector<4x512xf32>
      tpu.vector_store %arg6[%c0_17, %c0_18], %26 {strides = array<i32>} : memref<4x512xf32, #tpu.memory_space<vmem>>, vector<4x512xf32>,
    } else {
    }
    return
  }
  func.func @transform_0(%arg0: i32, %arg1: i32) -> (i32, i32) {
    %c0_i32 = arith.constant 0 : i32
    %c0_i32_0 = arith.constant 0 : i32
    %c0_i32_1 = arith.constant 0 : i32
    return %c0_i32, %c0_i32_0 : i32, i32
  }
  func.func @transform_1(%arg0: i32, %arg1: i32) -> (i32, i32, i32, i32) {
    %c0_i32 = arith.constant 0 : i32
    %c0_i32_0 = arith.constant 0 : i32
    %c0_i32_1 = arith.constant 0 : i32
    return %arg0, %arg1, %c0_i32, %c0_i32_0 : i32, i32, i32, i32
  }
  func.func @transform_2(%arg0: i32, %arg1: i32) -> (i32, i32, i32) {
    %c0_i32 = arith.constant 0 : i32
    %c0_i32_0 = arith.constant 0 : i32
    return %arg0, %c0_i32, %arg1 : i32, i32, i32
  }
  func.func @transform_3(%arg0: i32, %arg1: i32) -> (i32, i32, i32) {
    %c0_i32 = arith.constant 0 : i32
    %c0_i32_0 = arith.constant 0 : i32
    return %arg0, %c0_i32, %arg1 : i32, i32, i32
  }
  func.func @transform_4(%arg0: i32, %arg1: i32) -> (i32, i32) {
    %c0_i32 = arith.constant 0 : i32
    %c0_i32_0 = arith.constant 0 : i32
    return %c0_i32, %arg1 : i32, i32
  }
}

</mosaic_0001>

<llo_original>
// kernel: tpu_custom_call.1
$region0: #{tpu_custom_call.1}
  #allocation0 [shape = 'u32[]', space=smem, size = 0x4, offset = 0x4, fixed_abs, tag = 'smem constant byte address 0x4 - core index']
  #allocation1 [shape = 'u32[144,128]{1,0:T(1,128)}', space=vmem, size = 0x12000, scoped, tag = 'internal scratch']
  #allocation2 [shape = 'bf16[2,1,4,512]{3,2,1,0:T(4,128)(2,1)}', space=vmem, size = 0x2000, scoped, tag = 'scratch operand']
  %s0 = inlined_call_operand.hbm [shape: bf16[4,512], index: 0, kind: input, shape index: {}]
  %s1 = inlined_call_operand.hbm [shape: s8[3,1,512,512], index: 1, kind: input, shape index: {}]
  %s2 = inlined_call_operand.hbm [shape: f32[3,1,512], index: 2, kind: input, shape index: {}]
  %s3 = inlined_call_operand.hbm [shape: f32[3,1,512], index: 3, kind: input, shape index: {}]
  %s4 = inlined_call_operand.hbm [shape: f32[4,512], index: 4, kind: output, shape index: {}]
  %s5 = sld [smem:[#allocation0]]
  $region77: #{tpu_custom_call.1} parent=0
    _
  %s7 = ssub.s32 1, %s5
  %s8 = scalar_select 0, %s7, %s5
  $region1: #{tpu_custom_call.1} parent=0
    #allocation3 [shape = 'u8[4096]{0}', space=vmem, size = 0x1000, scoped, tag = 'input window, operand 0, single buffered']
    #allocation4 [shape = 's32[2]{0}', space=sflag, size = 0x8, scoped, tag = 'scoped memory for tpu_custom_call.1']
    #allocation5 [shape = 's32[2]{0}', space=sflag, size = 0x8, scoped, tag = 'scoped memory for tpu_custom_call.1']
    #allocation6 [shape = 'u8[524288]{0}', space=vmem, size = 0x80000, scoped, tag = 'input window, operand 1']
    #allocation7 [shape = 's32[2]{0}', space=sflag, size = 0x8, scoped, tag = 'scoped memory for tpu_custom_call.1']
    #allocation8 [shape = 'u8[4096]{0}', space=vmem, size = 0x1000, scoped, tag = 'input window, operand 2']
    #allocation9 [shape = 'u8[4096]{0}', space=vmem, size = 0x1000, scoped, tag = 'input window, operand 3']
    #allocation10 [shape = 's32[2]{0}', space=sflag, size = 0x8, scoped, tag = 'scoped memory for tpu_custom_call.1']
    #allocation11 [shape = 'u8[8192]{0}', space=vmem, size = 0x2000, scoped, tag = 'output window, operand 0, single buffered']
    %9 = vsyncpa [#allocation4], 0
    %10 = vsyncpa [#allocation7], 0
    %s11 = scalar_lea.sflag [#allocation7], 1
    %12 = vsyncpa %s11, 0
    %13 = vsyncpa [#allocation10], 0
    %s14 = scalar_lea.sflag [#allocation10], 1
    %15 = vsyncpa %s14, 0
    %16 = vsyncpa [#allocation5], 0
    loop: start=0, step=1, limit=5
    $region2: #{tpu_custom_call.1} parent=1 // loop_pre_header
      _
    $region3: #{tpu_custom_call.1} parent=1 // loop_header
      %s18 = sphi 0, %s22
      %p19 = scmp.ge.s32.totalorder %s18, 5
      %s25 = sphi 0, %s37
      %s26 = sphi 0, %s33
      %s27 = sphi 0, %s25
      %s28 = sphi 0, %s26
      %s29 = sphi 0, %s27
      %s30 = sphi 0, %s28
      %s38 = sphi 0, %s38
      %s40 = sphi 0, %s38
      %s41 = sphi 0, %s40
      %s55 = sphi 0, %s41
      %s63 = sphi 0, %s65
      %s66 = sphi 0, %s63
      %s67 = sphi 0, %s66
      %s83 = sphi 0, %s67
      %s91 = sphi 0, %s93
      %s94 = sphi 0, %s91
      %s95 = sphi 0, %s94
      %s111 = sphi 0, %s95
      %s119 = sphi 0, %s121
      %s122 = sphi 0, %s119
      %s123 = sphi 0, %s122
      %s139 = sphi 0, %s123
      %s145 = sphi 0, %s147
      %s148 = sphi 0, %s145
      %s149 = sphi 0, %s148
      %s165 = sphi 0, %s149
    $region4: #{tpu_custom_call.1} parent=1 // loop_header_branch
      %21 = sbr.rel (%p19) target = $region8
    $region5: #{tpu_custom_call.1} parent=1 // loop_body
      %s23 = ssub.s32 %s18, 1
      %s24 = ssub.s32 %s18, 2
      %s31 = sadd.s32 1, %s26
      %p32 = scmp.ge.s32.totalorder %s31, 1
      %s33 = scalar_select %p32, 0, %s31
      %s34 = sadd.s32 1, %s25
      %s35 = scalar_select %p32, %s34, %s25
      %p36 = scmp.ge.s32.totalorder %s35, 3
      %s37 = scalar_select %p36, 0, %s35
      %s39 = sadd.s32 %s38, 1
      %p42 = scmp.eq.s32.totalorder %s18, 2
      %p43 = scmp.ne.s32.totalorder %s38, %s40
      %p44 = scmp.eq.s32.totalorder %s18, 0
      %p45 = por %p43, %p44
      %p46 = scmp.ne.s32.totalorder %s38, %s40
      %p47 = scmp.eq.s32.totalorder %s23, 2
      %p48 = por %p46, %p47
      %p49 = scmp.ne.s32.totalorder %s40, %s41
      %p50 = scmp.eq.s32.totalorder %s23, 0
      %p51 = por %p49, %p50
      %p52 = scmp.ne.s32.totalorder %s40, %s41
      %p53 = scmp.eq.s32.totalorder %s24, 2
      %p54 = por %p52, %p53
      %p56 = scmp.ne.s32.totalorder %s41, %s55
      %p57 = scmp.eq.s32.totalorder %s24, 0
      %p58 = por %p56, %p57
      %s59 = ssub.s32 %s25, %s37
      %s60 = ssub.s32 %s26, %s33
      %s61 = sor.u32 %s59, %s60
      %p62 = scmp.eq.s32.totalorder %s61, 0
      %s64 = sadd.s32 %s63, 1
      %s65 = scalar_select %p62, %s63, %s64
      %p68 = pneg %p62
      %p69 = scmp.eq.s32.totalorder %s18, 2
      %p70 = por %p68, %p69
      %p71 = scmp.ne.s32.totalorder %s63, %s66
      %p72 = scmp.eq.s32.totalorder %s18, 0
      %p73 = por %p71, %p72
      %p74 = scmp.ne.s32.totalorder %s63, %s66
      %p75 = scmp.eq.s32.totalorder %s23, 2
      %p76 = por %p74, %p75
      %p77 = scmp.ne.s32.totalorder %s66, %s67
      %p78 = scmp.eq.s32.totalorder %s23, 0
      %p79 = por %p77, %p78
      %p80 = scmp.ne.s32.totalorder %s66, %s67
      %p81 = scmp.eq.s32.totalorder %s24, 2
      %p82 = por %p80, %p81
      %p84 = scmp.ne.s32.totalorder %s67, %s83
      %p85 = scmp.eq.s32.totalorder %s24, 0
      %p86 = por %p84, %p85
      %s87 = ssub.s32 %s25, %s37
      %s88 = ssub.s32 %s26, %s33
      %s89 = sor.u32 %s87, %s88
      %p90 = scmp.eq.s32.totalorder %s89, 0
      %s92 = sadd.s32 %s91, 1
      %s93 = scalar_select %p90, %s91, %s92
      %p96 = pneg %p90
      %p97 = scmp.eq.s32.totalorder %s18, 2
      %p98 = por %p96, %p97
      %p99 = scmp.ne.s32.totalorder %s91, %s94
      %p100 = scmp.eq.s32.totalorder %s18, 0
      %p101 = por %p99, %p100
      %p102 = scmp.ne.s32.totalorder %s91, %s94
      %p103 = scmp.eq.s32.totalorder %s23, 2
      %p104 = por %p102, %p103
      %p105 = scmp.ne.s32.totalorder %s94, %s95
      %p106 = scmp.eq.s32.totalorder %s23, 0
      %p107 = por %p105, %p106
      %p108 = scmp.ne.s32.totalorder %s94, %s95
      %p109 = scmp.eq.s32.totalorder %s24, 2
      %p110 = por %p108, %p109
      %p112 = scmp.ne.s32.totalorder %s95, %s111
      %p113 = scmp.eq.s32.totalorder %s24, 0
      %p114 = por %p112, %p113
      %s115 = ssub.s32 %s25, %s37
      %s116 = ssub.s32 %s26, %s33
      %s117 = sor.u32 %s115, %s116
      %p118 = scmp.eq.s32.totalorder %s117, 0
      %s120 = sadd.s32 %s119, 1
      %s121 = scalar_select %p118, %s119, %s120
      %p124 = pneg %p118
      %p125 = scmp.eq.s32.totalorder %s18, 2
      %p126 = por %p124, %p125
      %p127 = scmp.ne.s32.totalorder %s119, %s122
      %p128 = scmp.eq.s32.totalorder %s18, 0
      %p129 = por %p127, %p128
      %p130 = scmp.ne.s32.totalorder %s119, %s122
      %p131 = scmp.eq.s32.totalorder %s23, 2
      %p132 = por %p130, %p131
      %p133 = scmp.ne.s32.totalorder %s122, %s123
      %p134 = scmp.eq.s32.totalorder %s23, 0
      %p135 = por %p133, %p134
      %p136 = scmp.ne.s32.totalorder %s122, %s123
      %p137 = scmp.eq.s32.totalorder %s24, 2
      %p138 = por %p136, %p137
      %p140 = scmp.ne.s32.totalorder %s123, %s139
      %p141 = scmp.eq.s32.totalorder %s24, 0
      %p142 = por %p140, %p141
      %s143 = ssub.s32 %s26, %s33
      %p144 = scmp.eq.s32.totalorder %s143, 0
      %s146 = sadd.s32 %s145, 1
      %s147 = scalar_select %p144, %s145, %s146
      %p150 = pneg %p144
      %p151 = scmp.eq.s32.totalorder %s18, 2
      %p152 = por %p150, %p151
      %p153 = scmp.ne.s32.totalorder %s145, %s148
      %p154 = scmp.eq.s32.totalorder %s18, 0
      %p155 = por %p153, %p154
      %p156 = scmp.ne.s32.totalorder %s145, %s148
      %p157 = scmp.eq.s32.totalorder %s23, 2
      %p158 = por %p156, %p157
      %p159 = scmp.ne.s32.totalorder %s148, %s149
      %p160 = scmp.eq.s32.totalorder %s23, 0
      %p161 = por %p159, %p160
      %p162 = scmp.ne.s32.totalorder %s148, %s149
      %p163 = scmp.eq.s32.totalorder %s24, 2
      %p164 = por %p162, %p163
      %p166 = scmp.ne.s32.totalorder %s149, %s165
      %p167 = scmp.eq.s32.totalorder %s24, 0
      %p168 = por %p166, %p167
      %p169 = scmp.le.s32.totalorder 1, %s18
      %p170 = scmp.lt.s32.totalorder %s18, 4
      %p171 = pnand %p169, %p170
      %p172 = pneg %p171
      // Predicated region
      $region9: #{tpu_custom_call.1} parent=5 // pred_check
        _
      $region10: #{tpu_custom_call.1} parent=5 // pred_check_branch
        %174 = sbr.rel (%p171) target = $region12
      $region11: #{tpu_custom_call.1} parent=5 // pred_region
        %s175 = ssub.s32 %s18, 1
        // Predicated region
        $region13: #{tpu_custom_call.1} parent=11 // pred_check
          %p176 = pneg %p51
        $region14: #{tpu_custom_call.1} parent=11 // pred_check_branch
          %178 = sbr.rel (%p176) target = $region16
        $region15: #{tpu_custom_call.1} parent=11 // pred_region
          %s180 = ssub.s32 128, 128
          %181 = vsyncadd [#allocation4], %s180
          %s183 = sshll.u32 [#allocation3], 4
          %s184 = int_to_ptr.vmem [resolvable:$true] %s183
          %186 = dma.hbm_to_vmem [thread:$0]  %s0, 128, %s184, [#allocation4]
        $region16: #{tpu_custom_call.1} parent=11 // pred_fallthru
          _
      $region12: #{tpu_custom_call.1} parent=5 // pred_fallthru
        _
      %p187 = scmp.lt.s32.totalorder %s18, 3
      // Predicated region
      $region17: #{tpu_custom_call.1} parent=5 // pred_check
        %p188 = pneg %p187
      $region18: #{tpu_custom_call.1} parent=5 // pred_check_branch
        %190 = sbr.rel (%p188) target = $region20
      $region19: #{tpu_custom_call.1} parent=5 // pred_region
        // Predicated region
        $region21: #{tpu_custom_call.1} parent=19 // pred_check
          %p191 = pneg %p73
        $region22: #{tpu_custom_call.1} parent=19 // pred_check_branch
          %193 = sbr.rel (%p191) target = $region24
        $region23: #{tpu_custom_call.1} parent=19 // pred_region
          %s194 = sand.u32 %s18, 1
          %s195 = scalar_lea.sflag [#allocation7], %s194
          %s196 = sand.u32 %s63, 1
          %s197 = smul.addr %s196, 512
          %s198 = scalar_lea.vmem [#allocation6], %s197
          %s200 = ssub.s32 8192, 8192
          %201 = vsyncadd %s195, %s200
          %s202 = smul.addr %s26, 64
          %s203 = smul.addr %s25, 64
          %s204 = sadd.s32 %s202, %s203
          %s205 = smul.addr %s204, 128
          %s206 = scalar_lea.hbm %s1, %s205
          %s207 = sshll.u32 %s198, 4
          %s208 = int_to_ptr.vmem [resolvable:$true] %s207
          %213 = dma.hbm_to_vmem [thread:$0]  %s206, 8192, %s208, %s195, 512, 512, 32
        $region24: #{tpu_custom_call.1} parent=19 // pred_fallthru
          _
        // Predicated region
        $region25: #{tpu_custom_call.1} parent=19 // pred_check
          %p214 = pneg %p101
        $region26: #{tpu_custom_call.1} parent=19 // pred_check_branch
          %216 = sbr.rel (%p214) target = $region28
        $region27: #{tpu_custom_call.1} parent=19 // pred_region
          %s217 = sand.u32 %s18, 1
          %s218 = scalar_lea.sflag [#allocation7], %s217
          %s219 = sand.u32 %s91, 1
          %s220 = smul.addr %s219, 4
          %s221 = scalar_lea.vmem [#allocation8], %s220
          %s222 = smul.u32 4, %s26
          %s224 = ssub.s32 64, 64
          %225 = vsyncadd %s218, %s224
          %s226 = smul.addr %s25, 4
          %s227 = sadd.s32 %s222, %s226
          %s228 = smul.addr %s227, 16
          %s229 = scalar_lea.hbm %s2, %s228
          %s231 = sshll.u32 %s221, 4
          %s232 = int_to_ptr.vmem [resolvable:$true] %s231
          %234 = dma.hbm_to_vmem [thread:$0]  %s229, 64, %s232, %s218
        $region28: #{tpu_custom_call.1} parent=19 // pred_fallthru
          _
        // Predicated region
        $region29: #{tpu_custom_call.1} parent=19 // pred_check
          %p235 = pneg %p129
        $region30: #{tpu_custom_call.1} parent=19 // pred_check_branch
          %237 = sbr.rel (%p235) target = $region32
        $region31: #{tpu_custom_call.1} parent=19 // pred_region
          %s238 = sand.u32 %s119, 1
          %s239 = scalar_lea.sflag [#allocation10], %s238
          %s240 = sand.u32 %s119, 1
          %s241 = smul.addr %s240, 4
          %s242 = scalar_lea.vmem [#allocation9], %s241
          %s243 = smul.u32 4, %s26
          %s245 = ssub.s32 64, 64
          %246 = vsyncadd %s239, %s245
          %s247 = smul.addr %s25, 4
          %s248 = sadd.s32 %s243, %s247
          %s249 = smul.addr %s248, 16
          %s250 = scalar_lea.hbm %s3, %s249
          %s252 = sshll.u32 %s242, 4
          %s253 = int_to_ptr.vmem [resolvable:$true] %s252
          %255 = dma.hbm_to_vmem [thread:$0]  %s250, 64, %s253, %s239
        $region32: #{tpu_custom_call.1} parent=19 // pred_fallthru
          _
      $region20: #{tpu_custom_call.1} parent=5 // pred_fallthru
        _
      %p256 = scmp.le.s32.totalorder 1, %s18
      %p257 = scmp.lt.s32.totalorder %s18, 4
      %p258 = pnand %p256, %p257
      %p259 = pneg %p258
      // Predicated region
      $region33: #{tpu_custom_call.1} parent=5 // pred_check
        _
      $region34: #{tpu_custom_call.1} parent=5 // pred_check_branch
        %261 = sbr.rel (%p258) target = $region36
      $region35: #{tpu_custom_call.1} parent=5 // pred_region
        %s262 = ssub.s32 %s18, 1
        // Predicated region
        $region37: #{tpu_custom_call.1} parent=35 // pred_check
          %p263 = pneg %p51
        $region38: #{tpu_custom_call.1} parent=35 // pred_check_branch
          %265 = sbr.rel (%p263) target = $region40
        $region39: #{tpu_custom_call.1} parent=35 // pred_region
          %266 = dma.done [#allocation4], 128
        $region40: #{tpu_custom_call.1} parent=35 // pred_fallthru
          _
        %s267 = sand.u32 %s23, 1
        %s268 = scalar_lea.sflag [#allocation7], %s267
        %s269 = sand.u32 %s66, 1
        %s270 = smul.addr %s269, 512
        %s271 = scalar_lea.vmem [#allocation6], %s270
        // Predicated region
        $region41: #{tpu_custom_call.1} parent=35 // pred_check
          %p272 = pneg %p79
        $region42: #{tpu_custom_call.1} parent=35 // pred_check_branch
          %274 = sbr.rel (%p272) target = $region44
        $region43: #{tpu_custom_call.1} parent=35 // pred_region
          %275 = dma.done %s268, 8192
        $region44: #{tpu_custom_call.1} parent=35 // pred_fallthru
          _
        %s276 = sand.u32 %s23, 1
        %s277 = scalar_lea.sflag [#allocation7], %s276
        %s278 = sand.u32 %s94, 1
        %s279 = smul.addr %s278, 4
        %s280 = scalar_lea.vmem [#allocation8], %s279
        // Predicated region
        $region45: #{tpu_custom_call.1} parent=35 // pred_check
          %p281 = pneg %p107
        $region46: #{tpu_custom_call.1} parent=35 // pred_check_branch
          %283 = sbr.rel (%p281) target = $region48
        $region47: #{tpu_custom_call.1} parent=35 // pred_region
          %284 = dma.done %s277, 64
        $region48: #{tpu_custom_call.1} parent=35 // pred_fallthru
          _
        %s285 = sand.u32 %s122, 1
        %s286 = scalar_lea.sflag [#allocation10], %s285
        %s287 = sand.u32 %s122, 1
        %s288 = smul.addr %s287, 4
        %s289 = scalar_lea.vmem [#allocation9], %s288
        // Predicated region
        $region49: #{tpu_custom_call.1} parent=35 // pred_check
          %p290 = pneg %p135
        $region50: #{tpu_custom_call.1} parent=35 // pred_check_branch
          %292 = sbr.rel (%p290) target = $region52
        $region51: #{tpu_custom_call.1} parent=35 // pred_region
          %293 = dma.done %s286, 64
        $region52: #{tpu_custom_call.1} parent=35 // pred_fallthru
          _
        %p294 = pneg %p51
        %p295 = pneg %p48
        %s296 = sand.u32 %s23, 1
        %s297 = scalar_lea.sflag [#allocation7], %s296
        %s298 = sand.u32 %s66, 1
        %s299 = smul.addr %s298, 512
        %s300 = scalar_lea.vmem [#allocation6], %s299
        %p301 = pneg %p79
        %p302 = pneg %p76
        %s303 = sand.u32 %s23, 1
        %s304 = scalar_lea.sflag [#allocation7], %s303
        %s305 = sand.u32 %s94, 1
        %s306 = smul.addr %s305, 4
        %s307 = scalar_lea.vmem [#allocation8], %s306
        %p308 = pneg %p107
        %p309 = pneg %p104
        %s310 = sand.u32 %s122, 1
        %s311 = scalar_lea.sflag [#allocation10], %s310
        %s312 = sand.u32 %s122, 1
        %s313 = smul.addr %s312, 4
        %s314 = scalar_lea.vmem [#allocation9], %s313
        %p315 = pneg %p135
        %p316 = pneg %p132
        %p317 = pneg %p161
        %p318 = pneg %p158
        %s319 = smul.u32 4, %s28
        %s320 = smul.u32 4, %s28
        %s321 = smul.u32 4, %s28
        %v322 = vld [vmem:[%s271] sm:$0xff]
        %v323 = vld [vmem:[%s271 + $0x8] sm:$0xff]
        %v324 = vld [vmem:[%s271 + $0x10] sm:$0xff]
        %v325 = vld [vmem:[%s271 + $0x18] sm:$0xff]
        %v326 = vld [vmem:[%s271 + $0x20] sm:$0xff]
        %v327 = vld [vmem:[%s271 + $0x28] sm:$0xff]
        %v328 = vld [vmem:[%s271 + $0x30] sm:$0xff]
        %v329 = vld [vmem:[%s271 + $0x38] sm:$0xff]
        %v330 = vld [vmem:[%s271 + $0x40] sm:$0xff]
        %v331 = vld [vmem:[%s271 + $0x48] sm:$0xff]
        %v332 = vld [vmem:[%s271 + $0x50] sm:$0xff]
        %v333 = vld [vmem:[%s271 + $0x58] sm:$0xff]
        %v334 = vld [vmem:[%s271 + $0x60] sm:$0xff]
        %v335 = vld [vmem:[%s271 + $0x68] sm:$0xff]
        %v336 = vld [vmem:[%s271 + $0x70] sm:$0xff]
        %v337 = vld [vmem:[%s271 + $0x78] sm:$0xff]
        %v338 = vld [vmem:[%s271 + $0x80] sm:$0xff]
        %v339 = vld [vmem:[%s271 + $0x88] sm:$0xff]
        %v340 = vld [vmem:[%s271 + $0x90] sm:$0xff]
        %v341 = vld [vmem:[%s271 + $0x98] sm:$0xff]
        %v342 = vld [vmem:[%s271 + $0xa0] sm:$0xff]
        %v343 = vld [vmem:[%s271 + $0xa8] sm:$0xff]
        %v344 = vld [vmem:[%s271 + $0xb0] sm:$0xff]
        %v345 = vld [vmem:[%s271 + $0xb8] sm:$0xff]
        %v346 = vld [vmem:[%s271 + $0xc0] sm:$0xff]
        %v347 = vld [vmem:[%s271 + $0xc8] sm:$0xff]
        %v348 = vld [vmem:[%s271 + $0xd0] sm:$0xff]
        %v349 = vld [vmem:[%s271 + $0xd8] sm:$0xff]
        %v350 = vld [vmem:[%s271 + $0xe0] sm:$0xff]
        %v351 = vld [vmem:[%s271 + $0xe8] sm:$0xff]
        %v352 = vld [vmem:[%s271 + $0xf0] sm:$0xff]
        %v353 = vld [vmem:[%s271 + $0xf8] sm:$0xff]
        %v354 = vld [vmem:[%s271 + $0x100] sm:$0xff]
        %v355 = vld [vmem:[%s271 + $0x108] sm:$0xff]
        %v356 = vld [vmem:[%s271 + $0x110] sm:$0xff]
        %v357 = vld [vmem:[%s271 + $0x118] sm:$0xff]
        %v358 = vld [vmem:[%s271 + $0x120] sm:$0xff]
        %v359 = vld [vmem:[%s271 + $0x128] sm:$0xff]
        %v360 = vld [vmem:[%s271 + $0x130] sm:$0xff]
        %v361 = vld [vmem:[%s271 + $0x138] sm:$0xff]
        %v362 = vld [vmem:[%s271 + $0x140] sm:$0xff]
        %v363 = vld [vmem:[%s271 + $0x148] sm:$0xff]
        %v364 = vld [vmem:[%s271 + $0x150] sm:$0xff]
        %v365 = vld [vmem:[%s271 + $0x158] sm:$0xff]
        %v366 = vld [vmem:[%s271 + $0x160] sm:$0xff]
        %v367 = vld [vmem:[%s271 + $0x168] sm:$0xff]
        %v368 = vld [vmem:[%s271 + $0x170] sm:$0xff]
        %v369 = vld [vmem:[%s271 + $0x178] sm:$0xff]
        %v370 = vld [vmem:[%s271 + $0x180] sm:$0xff]
        %v371 = vld [vmem:[%s271 + $0x188] sm:$0xff]
        %v372 = vld [vmem:[%s271 + $0x190] sm:$0xff]
        %v373 = vld [vmem:[%s271 + $0x198] sm:$0xff]
        %v374 = vld [vmem:[%s271 + $0x1a0] sm:$0xff]
        %v375 = vld [vmem:[%s271 + $0x1a8] sm:$0xff]
        %v376 = vld [vmem:[%s271 + $0x1b0] sm:$0xff]
        %v377 = vld [vmem:[%s271 + $0x1b8] sm:$0xff]
        %v378 = vld [vmem:[%s271 + $0x1c0] sm:$0xff]
        %v379 = vld [vmem:[%s271 + $0x1c8] sm:$0xff]
        %v380 = vld [vmem:[%s271 + $0x1d0] sm:$0xff]
        %v381 = vld [vmem:[%s271 + $0x1d8] sm:$0xff]
        %v382 = vld [vmem:[%s271 + $0x1e0] sm:$0xff]
        %v383 = vld [vmem:[%s271 + $0x1e8] sm:$0xff]
        %v384 = vld [vmem:[%s271 + $0x1f0] sm:$0xff]
        %v385 = vld [vmem:[%s271 + $0x1f8] sm:$0xff]
        %v386 = vunpack.c.l.s8.bf16 %v322
        %v387 = vunpack.c.l.s8.bf16 %v323
        %v388 = vunpack.c.l.s8.bf16 %v324
        %v389 = vunpack.c.l.s8.bf16 %v325
        %v390 = vunpack.c.h.s8.bf16 %v322
        %v391 = vunpack.c.h.s8.bf16 %v323
        %v392 = vunpack.c.h.s8.bf16 %v324
        %v393 = vunpack.c.h.s8.bf16 %v325
        %v394 = vunpack.c.l.s8.bf16 %v326
        %v395 = vunpack.c.l.s8.bf16 %v327
        %v396 = vunpack.c.l.s8.bf16 %v328
        %v397 = vunpack.c.l.s8.bf16 %v329
        %v398 = vunpack.c.h.s8.bf16 %v326
        %v399 = vunpack.c.h.s8.bf16 %v327
        %v400 = vunpack.c.h.s8.bf16 %v328
        %v401 = vunpack.c.h.s8.bf16 %v329
        %v402 = vunpack.c.l.s8.bf16 %v330
        %v403 = vunpack.c.l.s8.bf16 %v331
        %v404 = vunpack.c.l.s8.bf16 %v332
        %v405 = vunpack.c.l.s8.bf16 %v333
        %v406 = vunpack.c.h.s8.bf16 %v330
        %v407 = vunpack.c.h.s8.bf16 %v331
        %v408 = vunpack.c.h.s8.bf16 %v332
        %v409 = vunpack.c.h.s8.bf16 %v333
        %v410 = vunpack.c.l.s8.bf16 %v334
        %v411 = vunpack.c.l.s8.bf16 %v335
        %v412 = vunpack.c.l.s8.bf16 %v336
        %v413 = vunpack.c.l.s8.bf16 %v337
        %v414 = vunpack.c.h.s8.bf16 %v334
        %v415 = vunpack.c.h.s8.bf16 %v335
        %v416 = vunpack.c.h.s8.bf16 %v336
        %v417 = vunpack.c.h.s8.bf16 %v337
        %v418 = vunpack.c.l.s8.bf16 %v338
        %v419 = vunpack.c.l.s8.bf16 %v339
        %v420 = vunpack.c.l.s8.bf16 %v340
        %v421 = vunpack.c.l.s8.bf16 %v341
        %v422 = vunpack.c.h.s8.bf16 %v338
        %v423 = vunpack.c.h.s8.bf16 %v339
        %v424 = vunpack.c.h.s8.bf16 %v340
        %v425 = vunpack.c.h.s8.bf16 %v341
        %v426 = vunpack.c.l.s8.bf16 %v342
        %v427 = vunpack.c.l.s8.bf16 %v343
        %v428 = vunpack.c.l.s8.bf16 %v344
        %v429 = vunpack.c.l.s8.bf16 %v345
        %v430 = vunpack.c.h.s8.bf16 %v342
        %v431 = vunpack.c.h.s8.bf16 %v343
        %v432 = vunpack.c.h.s8.bf16 %v344
        %v433 = vunpack.c.h.s8.bf16 %v345
        %v434 = vunpack.c.l.s8.bf16 %v346
        %v435 = vunpack.c.l.s8.bf16 %v347
        %v436 = vunpack.c.l.s8.bf16 %v348
        %v437 = vunpack.c.l.s8.bf16 %v349
        %v438 = vunpack.c.h.s8.bf16 %v346
        %v439 = vunpack.c.h.s8.bf16 %v347
        %v440 = vunpack.c.h.s8.bf16 %v348
        %v441 = vunpack.c.h.s8.bf16 %v349
        %v442 = vunpack.c.l.s8.bf16 %v350
        %v443 = vunpack.c.l.s8.bf16 %v351
        %v444 = vunpack.c.l.s8.bf16 %v352
        %v445 = vunpack.c.l.s8.bf16 %v353
        %v446 = vunpack.c.h.s8.bf16 %v350
        %v447 = vunpack.c.h.s8.bf16 %v351
        %v448 = vunpack.c.h.s8.bf16 %v352
        %v449 = vunpack.c.h.s8.bf16 %v353
        %v450 = vunpack.c.l.s8.bf16 %v354
        %v451 = vunpack.c.l.s8.bf16 %v355
        %v452 = vunpack.c.l.s8.bf16 %v356
        %v453 = vunpack.c.l.s8.bf16 %v357
        %v454 = vunpack.c.h.s8.bf16 %v354
        %v455 = vunpack.c.h.s8.bf16 %v355
        %v456 = vunpack.c.h.s8.bf16 %v356
        %v457 = vunpack.c.h.s8.bf16 %v357
        %v458 = vunpack.c.l.s8.bf16 %v358
        %v459 = vunpack.c.l.s8.bf16 %v359
        %v460 = vunpack.c.l.s8.bf16 %v360
        %v461 = vunpack.c.l.s8.bf16 %v361
        %v462 = vunpack.c.h.s8.bf16 %v358
        %v463 = vunpack.c.h.s8.bf16 %v359
        %v464 = vunpack.c.h.s8.bf16 %v360
        %v465 = vunpack.c.h.s8.bf16 %v361
        %v466 = vunpack.c.l.s8.bf16 %v362
        %v467 = vunpack.c.l.s8.bf16 %v363
        %v468 = vunpack.c.l.s8.bf16 %v364
        %v469 = vunpack.c.l.s8.bf16 %v365
        %v470 = vunpack.c.h.s8.bf16 %v362
        %v471 = vunpack.c.h.s8.bf16 %v363
        %v472 = vunpack.c.h.s8.bf16 %v364
        %v473 = vunpack.c.h.s8.bf16 %v365
        %v474 = vunpack.c.l.s8.bf16 %v366
        %v475 = vunpack.c.l.s8.bf16 %v367
        %v476 = vunpack.c.l.s8.bf16 %v368
        %v477 = vunpack.c.l.s8.bf16 %v369
        %v478 = vunpack.c.h.s8.bf16 %v366
        %v479 = vunpack.c.h.s8.bf16 %v367
        %v480 = vunpack.c.h.s8.bf16 %v368
        %v481 = vunpack.c.h.s8.bf16 %v369
        %v482 = vunpack.c.l.s8.bf16 %v370
        %v483 = vunpack.c.l.s8.bf16 %v371
        %v484 = vunpack.c.l.s8.bf16 %v372
        %v485 = vunpack.c.l.s8.bf16 %v373
        %v486 = vunpack.c.h.s8.bf16 %v370
        %v487 = vunpack.c.h.s8.bf16 %v371
        %v488 = vunpack.c.h.s8.bf16 %v372
        %v489 = vunpack.c.h.s8.bf16 %v373
        %v490 = vunpack.c.l.s8.bf16 %v374
        %v491 = vunpack.c.l.s8.bf16 %v375
        %v492 = vunpack.c.l.s8.bf16 %v376
        %v493 = vunpack.c.l.s8.bf16 %v377
        %v494 = vunpack.c.h.s8.bf16 %v374
        %v495 = vunpack.c.h.s8.bf16 %v375
        %v496 = vunpack.c.h.s8.bf16 %v376
        %v497 = vunpack.c.h.s8.bf16 %v377
        %v498 = vunpack.c.l.s8.bf16 %v378
        %v499 = vunpack.c.l.s8.bf16 %v379
        %v500 = vunpack.c.l.s8.bf16 %v380
        %v501 = vunpack.c.l.s8.bf16 %v381
        %v502 = vunpack.c.h.s8.bf16 %v378
        %v503 = vunpack.c.h.s8.bf16 %v379
        %v504 = vunpack.c.h.s8.bf16 %v380
        %v505 = vunpack.c.h.s8.bf16 %v381
        %v506 = vunpack.c.l.s8.bf16 %v382
        %v507 = vunpack.c.l.s8.bf16 %v383
        %v508 = vunpack.c.l.s8.bf16 %v384
        %v509 = vunpack.c.l.s8.bf16 %v385
        %v510 = vunpack.c.h.s8.bf16 %v382
        %v511 = vunpack.c.h.s8.bf16 %v383
        %v512 = vunpack.c.h.s8.bf16 %v384
        %v513 = vunpack.c.h.s8.bf16 %v385
        %p514 = scmp.eq.s32.totalorder %s27, 0
        // Predicated region
        $region53: #{tpu_custom_call.1} parent=35 // pred_check
          %p515 = pneg %p514
        $region54: #{tpu_custom_call.1} parent=35 // pred_check_branch
          %517 = sbr.rel (%p515) target = $region56
        $region55: #{tpu_custom_call.1} parent=35 // pred_region
          %v518 = vld [vmem:[#allocation3] sm:$0xff]
          %v520 = vcombine.high %v518, %v518
          %v522 = vunpack.c.l.s4 1983009808
          %v523 = vunpack.c.0.s8 %v522
          %v524 = vlaneseq
          %v525 = vshrl.u32 %v524, 7
          %v526 = vsub.s32 %v523, %v525
          %v527 = vrot.slane %v518, %v526
          %v529 = vunpack.c.l.s4 1983009808
          %v530 = vunpack.c.0.s8 %v529
          %v531 = vlaneseq
          %v532 = vshrl.u32 %v531, 7
          %v533 = vsub.s32 %v530, %v532
          %v534 = vrot.slane %v520, %v533
          %v535 = vcombine.high %v527, %v527
          %v536 = vcombine.high %v534, %v534
          %541 = vmatprep.subr.bf16.mxu0 %v387
          %542 = vmatpush1.bf16.msra.mxu0 %v386
          %543 = vmatprep.subr.bf16.mxu0 %v391
          %544 = vmatpush1.bf16.msra.mxu0 %v390
          %545 = vmatprep.subr.bf16.mxu0 %v395
          %546 = vmatpush1.bf16.msra.mxu0 %v394
          %547 = vmatprep.subr.bf16.mxu0 %v399
          %548 = vmatpush1.bf16.msra.mxu0 %v398
          %549 = vmatprep.subr.bf16.mxu0 %v403
          %550 = vmatpush1.bf16.msra.mxu0 %v402
          %551 = vmatprep.subr.bf16.mxu0 %v407
          %552 = vmatpush1.bf16.msra.mxu0 %v406
          %553 = vmatprep.subr.bf16.mxu0 %v411
          %554 = vmatpush1.bf16.msra.mxu0 %v410
          %555 = vmatprep.subr.bf16.mxu0 %v415
          %556 = vmatpush1.bf16.msra.mxu0 %v414
          %557 = vmatprep.subr.bf16.mxu0 %v419
          %558 = vmatpush1.bf16.msra.mxu0 %v418
          %559 = vmatprep.subr.bf16.mxu0 %v423
          %560 = vmatpush1.bf16.msra.mxu0 %v422
          %561 = vmatprep.subr.bf16.mxu0 %v427
          %562 = vmatpush1.bf16.msra.mxu0 %v426
          %563 = vmatprep.subr.bf16.mxu0 %v431
          %564 = vmatpush1.bf16.msra.mxu0 %v430
          %565 = vmatprep.subr.bf16.mxu0 %v435
          %566 = vmatpush1.bf16.msra.mxu0 %v434
          %567 = vmatprep.subr.bf16.mxu0 %v439
          %568 = vmatpush1.bf16.msra.mxu0 %v438
          %569 = vmatprep.subr.bf16.mxu0 %v443
          %570 = vmatpush1.bf16.msra.mxu0 %v442
          %571 = vmatprep.subr.bf16.mxu0 %v447
          %572 = vmatpush1.bf16.msra.mxu0 %v446
          %573 = vmatprep.mubr.bf16.mxu0 %v535
          %574 = vmatmul.mubr.bf16.gmra.mrb[0].mxu0 %v527
          %v575 = vpop.f32.mrb[0].mxu0
          %v576 = vadd.f32 0.0, %v575
          %v577 = vpop.f32.mrb[0].mxu0
          %v578 = vadd.f32 0.0, %v577
          %v579 = vpop.f32.mrb[0].mxu0
          %v580 = vpop.f32.mrb[0].mxu0
          %581 = vdwg.mxu0
          %582 = vmatprep.subr.bf16.mxu0 %v451
          %583 = vmatpush1.bf16.msra.mxu0 %v450
          %584 = vmatprep.subr.bf16.mxu0 %v455
          %585 = vmatpush1.bf16.msra.mxu0 %v454
          %586 = vmatprep.subr.bf16.mxu0 %v459
          %587 = vmatpush1.bf16.msra.mxu0 %v458
          %588 = vmatprep.subr.bf16.mxu0 %v463
          %589 = vmatpush1.bf16.msra.mxu0 %v462
          %590 = vmatprep.subr.bf16.mxu0 %v467
          %591 = vmatpush1.bf16.msra.mxu0 %v466
          %592 = vmatprep.subr.bf16.mxu0 %v471
          %593 = vmatpush1.bf16.msra.mxu0 %v470
          %594 = vmatprep.subr.bf16.mxu0 %v475
          %595 = vmatpush1.bf16.msra.mxu0 %v474
          %596 = vmatprep.subr.bf16.mxu0 %v479
          %597 = vmatpush1.bf16.msra.mxu0 %v478
          %598 = vmatprep.subr.bf16.mxu0 %v483
          %599 = vmatpush1.bf16.msra.mxu0 %v482
          %600 = vmatprep.subr.bf16.mxu0 %v487
          %601 = vmatpush1.bf16.msra.mxu0 %v486
          %602 = vmatprep.subr.bf16.mxu0 %v491
          %603 = vmatpush1.bf16.msra.mxu0 %v490
          %604 = vmatprep.subr.bf16.mxu0 %v495
          %605 = vmatpush1.bf16.msra.mxu0 %v494
          %606 = vmatprep.subr.bf16.mxu0 %v499
          %607 = vmatpush1.bf16.msra.mxu0 %v498
          %608 = vmatprep.subr.bf16.mxu0 %v503
          %609 = vmatpush1.bf16.msra.mxu0 %v502
          %610 = vmatprep.subr.bf16.mxu0 %v507
          %611 = vmatpush1.bf16.msra.mxu0 %v506
          %612 = vmatprep.subr.bf16.mxu0 %v511
          %613 = vmatpush1.bf16.msra.mxu0 %v510
          %614 = vmatprep.mubr.bf16.mxu0 %v536
          %615 = vmatmul.mubr.bf16.gmra.mrb[0].mxu0 %v534
          %v616 = vpop.f32.mrb[0].mxu0
          %v617 = vadd.f32 %v576, %v616
          %v618 = vpop.f32.mrb[0].mxu0
          %v619 = vadd.f32 %v578, %v618
          %v620 = vpop.f32.mrb[0].mxu0
          %v621 = vpop.f32.mrb[0].mxu0
          %622 = vdwg.mxu0
          %623 = vmatprep.subr.bf16.mxu0 %v389
          %624 = vmatpush1.bf16.msra.mxu0 %v388
          %625 = vmatprep.subr.bf16.mxu0 %v393
          %626 = vmatpush1.bf16.msra.mxu0 %v392
          %627 = vmatprep.subr.bf16.mxu0 %v397
          %628 = vmatpush1.bf16.msra.mxu0 %v396
          %629 = vmatprep.subr.bf16.mxu0 %v401
          %630 = vmatpush1.bf16.msra.mxu0 %v400
          %631 = vmatprep.subr.bf16.mxu0 %v405
          %632 = vmatpush1.bf16.msra.mxu0 %v404
          %633 = vmatprep.subr.bf16.mxu0 %v409
          %634 = vmatpush1.bf16.msra.mxu0 %v408
          %635 = vmatprep.subr.bf16.mxu0 %v413
          %636 = vmatpush1.bf16.msra.mxu0 %v412
          %637 = vmatprep.subr.bf16.mxu0 %v417
          %638 = vmatpush1.bf16.msra.mxu0 %v416
          %639 = vmatprep.subr.bf16.mxu0 %v421
          %640 = vmatpush1.bf16.msra.mxu0 %v420
          %641 = vmatprep.subr.bf16.mxu0 %v425
          %642 = vmatpush1.bf16.msra.mxu0 %v424
          %643 = vmatprep.subr.bf16.mxu0 %v429
          %644 = vmatpush1.bf16.msra.mxu0 %v428
          %645 = vmatprep.subr.bf16.mxu0 %v433
          %646 = vmatpush1.bf16.msra.mxu0 %v432
          %647 = vmatprep.subr.bf16.mxu0 %v437
          %648 = vmatpush1.bf16.msra.mxu0 %v436
          %649 = vmatprep.subr.bf16.mxu0 %v441
          %650 = vmatpush1.bf16.msra.mxu0 %v440
          %651 = vmatprep.subr.bf16.mxu0 %v445
          %652 = vmatpush1.bf16.msra.mxu0 %v444
          %653 = vmatprep.subr.bf16.mxu0 %v449
          %654 = vmatpush1.bf16.msra.mxu0 %v448
          %655 = vmatprep.mubr.bf16.mxu0 %v535
          %656 = vmatmul.mubr.bf16.gmra.mrb[0].mxu0 %v527
          %v657 = vpop.f32.mrb[0].mxu0
          %v658 = vadd.f32 0.0, %v657
          %v659 = vpop.f32.mrb[0].mxu0
          %v660 = vadd.f32 0.0, %v659
          %v661 = vpop.f32.mrb[0].mxu0
          %v662 = vpop.f32.mrb[0].mxu0
          %663 = vdwg.mxu0
          %664 = vmatprep.subr.bf16.mxu0 %v453
          %665 = vmatpush1.bf16.msra.mxu0 %v452
          %666 = vmatprep.subr.bf16.mxu0 %v457
          %667 = vmatpush1.bf16.msra.mxu0 %v456
          %668 = vmatprep.subr.bf16.mxu0 %v461
          %669 = vmatpush1.bf16.msra.mxu0 %v460
          %670 = vmatprep.subr.bf16.mxu0 %v465
          %671 = vmatpush1.bf16.msra.mxu0 %v464
          %672 = vmatprep.subr.bf16.mxu0 %v469
          %673 = vmatpush1.bf16.msra.mxu0 %v468
          %674 = vmatprep.subr.bf16.mxu0 %v473
          %675 = vmatpush1.bf16.msra.mxu0 %v472
          %676 = vmatprep.subr.bf16.mxu0 %v477
          %677 = vmatpush1.bf16.msra.mxu0 %v476
          %678 = vmatprep.subr.bf16.mxu0 %v481
          %679 = vmatpush1.bf16.msra.mxu0 %v480
          %680 = vmatprep.subr.bf16.mxu0 %v485
          %681 = vmatpush1.bf16.msra.mxu0 %v484
          %682 = vmatprep.subr.bf16.mxu0 %v489
          %683 = vmatpush1.bf16.msra.mxu0 %v488
          %684 = vmatprep.subr.bf16.mxu0 %v493
          %685 = vmatpush1.bf16.msra.mxu0 %v492
          %686 = vmatprep.subr.bf16.mxu0 %v497
          %687 = vmatpush1.bf16.msra.mxu0 %v496
          %688 = vmatprep.subr.bf16.mxu0 %v501
          %689 = vmatpush1.bf16.msra.mxu0 %v500
          %690 = vmatprep.subr.bf16.mxu0 %v505
          %691 = vmatpush1.bf16.msra.mxu0 %v504
          %692 = vmatprep.subr.bf16.mxu0 %v509
          %693 = vmatpush1.bf16.msra.mxu0 %v508
          %694 = vmatprep.subr.bf16.mxu0 %v513
          %695 = vmatpush1.bf16.msra.mxu0 %v512
          %696 = vmatprep.mubr.bf16.mxu0 %v536
          %697 = vmatmul.mubr.bf16.gmra.mrb[0].mxu0 %v534
          %v698 = vpop.f32.mrb[0].mxu0
          %v699 = vadd.f32 %v658, %v698
          %v700 = vpop.f32.mrb[0].mxu0
          %v701 = vadd.f32 %v660, %v700
          %v702 = vpop.f32.mrb[0].mxu0
          %v703 = vpop.f32.mrb[0].mxu0
          %704 = vdwg.mxu0
          %v705 = vld [vmem:[%s280] sm:$0xf]
          %v707 = vlaneseq
          %v708 = vshrl.u32 %v707, 7
          %v709 = vsub.s32 0, %v708
          %v710 = vrot.slane %v705, %v709
          %v711 = vlaneseq
          %v712 = vshrl.u32 %v711, 7
          %v713 = vsub.s32 1, %v712
          %v714 = vrot.slane %v705, %v713
          %v715 = vlaneseq
          %v716 = vshrl.u32 %v715, 7
          %v717 = vsub.s32 2, %v716
          %v718 = vrot.slane %v705, %v717
          %v719 = vlaneseq
          %v720 = vshrl.u32 %v719, 7
          %v721 = vsub.s32 3, %v720
          %v722 = vrot.slane %v705, %v721
          %v727 = vmul.f32 %v617, %v710
          %v728 = vmul.f32 %v619, %v714
          %v729 = vmul.f32 %v699, %v718
          %v730 = vmul.f32 %v701, %v722
          %v731 = vld [vmem:[%s289] sm:$0xf]
          %v733 = vlaneseq
          %v734 = vshrl.u32 %v733, 7
          %v735 = vsub.s32 0, %v734
          %v736 = vrot.slane %v731, %v735
          %v737 = vlaneseq
          %v738 = vshrl.u32 %v737, 7
          %v739 = vsub.s32 1, %v738
          %v740 = vrot.slane %v731, %v739
          %v741 = vlaneseq
          %v742 = vshrl.u32 %v741, 7
          %v743 = vsub.s32 2, %v742
          %v744 = vrot.slane %v731, %v743
          %v745 = vlaneseq
          %v746 = vshrl.u32 %v745, 7
          %v747 = vsub.s32 3, %v746
          %v748 = vrot.slane %v731, %v747
          %v753 = vadd.f32 %v727, %v736
          %v754 = vadd.f32 %v728, %v740
          %v755 = vadd.f32 %v729, %v744
          %v756 = vadd.f32 %v730, %v748
          %v757 = vmax.f32 %v753, 0.0
          %v758 = vmax.f32 %v754, 0.0
          %v759 = vmax.f32 %v755, 0.0
          %v760 = vmax.f32 %v756, 0.0
          %v761 = vpack.c.bf16 %v757, %v757
          %v762 = vpack.c.bf16 %v758, %v758
          %v763 = vpack.c.bf16 %v759, %v759
          %v764 = vpack.c.bf16 %v760, %v760
          %v769 = vcombine.low %v761, %v762
          %v770 = vcombine.low %v763, %v764
          %v772 = vunpack.c.l.s4 1983009808
          %v773 = vunpack.c.0.s8 %v772
          %v774 = vlaneseq
          %v775 = vshrl.u32 %v774, 7
          %v776 = vsub.s32 %v773, %v775
          %v777 = vrot.slane %v769, %v776
          %v779 = vunpack.c.l.s4 1983009808
          %v780 = vunpack.c.0.s8 %v779
          %v781 = vlaneseq
          %v782 = vshrl.u32 %v781, 7
          %v783 = vsub.s32 %v780, %v782
          %v784 = vrot.slane %v770, %v783
          %v785 = vcombine.low %v777, %v784
          %s787 = smul.u32 %s28, 4
          %s788 = smul.addr %s787, 2
          %s789 = scalar_lea.vmem [#allocation2], %s788
          %790 = vst [vmem:[%s789] sm:$0xff] %v785
        $region56: #{tpu_custom_call.1} parent=35 // pred_fallthru
          _
        %p791 = scmp.eq.s32.totalorder %s27, 1
        // Predicated region
        $region57: #{tpu_custom_call.1} parent=35 // pred_check
          %p792 = pneg %p791
        $region58: #{tpu_custom_call.1} parent=35 // pred_check_branch
          %794 = sbr.rel (%p792) target = $region60
        $region59: #{tpu_custom_call.1} parent=35 // pred_region
          %v795 = vld [vmem:[#allocation2] sm:$0xff]
          %v797 = vcombine.high %v795, %v795
          %v799 = vunpack.c.l.s4 1983009808
          %v800 = vunpack.c.0.s8 %v799
          %v801 = vlaneseq
          %v802 = vshrl.u32 %v801, 7
          %v803 = vsub.s32 %v800, %v802
          %v804 = vrot.slane %v795, %v803
          %v806 = vunpack.c.l.s4 1983009808
          %v807 = vunpack.c.0.s8 %v806
          %v808 = vlaneseq
          %v809 = vshrl.u32 %v808, 7
          %v810 = vsub.s32 %v807, %v809
          %v811 = vrot.slane %v797, %v810
          %v812 = vcombine.high %v804, %v804
          %v813 = vcombine.high %v811, %v811
          %818 = vmatprep.subr.bf16.mxu0 %v387
          %819 = vmatpush1.bf16.msra.mxu0 %v386
          %820 = vmatprep.subr.bf16.mxu0 %v391
          %821 = vmatpush1.bf16.msra.mxu0 %v390
          %822 = vmatprep.subr.bf16.mxu0 %v395
          %823 = vmatpush1.bf16.msra.mxu0 %v394
          %824 = vmatprep.subr.bf16.mxu0 %v399
          %825 = vmatpush1.bf16.msra.mxu0 %v398
          %826 = vmatprep.subr.bf16.mxu0 %v403
          %827 = vmatpush1.bf16.msra.mxu0 %v402
          %828 = vmatprep.subr.bf16.mxu0 %v407
          %829 = vmatpush1.bf16.msra.mxu0 %v406
          %830 = vmatprep.subr.bf16.mxu0 %v411
          %831 = vmatpush1.bf16.msra.mxu0 %v410
          %832 = vmatprep.subr.bf16.mxu0 %v415
          %833 = vmatpush1.bf16.msra.mxu0 %v414
          %834 = vmatprep.subr.bf16.mxu0 %v419
          %835 = vmatpush1.bf16.msra.mxu0 %v418
          %836 = vmatprep.subr.bf16.mxu0 %v423
          %837 = vmatpush1.bf16.msra.mxu0 %v422
          %838 = vmatprep.subr.bf16.mxu0 %v427
          %839 = vmatpush1.bf16.msra.mxu0 %v426
          %840 = vmatprep.subr.bf16.mxu0 %v431
          %841 = vmatpush1.bf16.msra.mxu0 %v430
          %842 = vmatprep.subr.bf16.mxu0 %v435
          %843 = vmatpush1.bf16.msra.mxu0 %v434
          %844 = vmatprep.subr.bf16.mxu0 %v439
          %845 = vmatpush1.bf16.msra.mxu0 %v438
          %846 = vmatprep.subr.bf16.mxu0 %v443
          %847 = vmatpush1.bf16.msra.mxu0 %v442
          %848 = vmatprep.subr.bf16.mxu0 %v447
          %849 = vmatpush1.bf16.msra.mxu0 %v446
          %850 = vmatprep.mubr.bf16.mxu0 %v812
          %851 = vmatmul.mubr.bf16.gmra.mrb[0].mxu0 %v804
          %v852 = vpop.f32.mrb[0].mxu0
          %v853 = vadd.f32 0.0, %v852
          %v854 = vpop.f32.mrb[0].mxu0
          %v855 = vadd.f32 0.0, %v854
          %v856 = vpop.f32.mrb[0].mxu0
          %v857 = vpop.f32.mrb[0].mxu0
          %858 = vdwg.mxu0
          %859 = vmatprep.subr.bf16.mxu0 %v451
          %860 = vmatpush1.bf16.msra.mxu0 %v450
          %861 = vmatprep.subr.bf16.mxu0 %v455
          %862 = vmatpush1.bf16.msra.mxu0 %v454
          %863 = vmatprep.subr.bf16.mxu0 %v459
          %864 = vmatpush1.bf16.msra.mxu0 %v458
          %865 = vmatprep.subr.bf16.mxu0 %v463
          %866 = vmatpush1.bf16.msra.mxu0 %v462
          %867 = vmatprep.subr.bf16.mxu0 %v467
          %868 = vmatpush1.bf16.msra.mxu0 %v466
          %869 = vmatprep.subr.bf16.mxu0 %v471
          %870 = vmatpush1.bf16.msra.mxu0 %v470
          %871 = vmatprep.subr.bf16.mxu0 %v475
          %872 = vmatpush1.bf16.msra.mxu0 %v474
          %873 = vmatprep.subr.bf16.mxu0 %v479
          %874 = vmatpush1.bf16.msra.mxu0 %v478
          %875 = vmatprep.subr.bf16.mxu0 %v483
          %876 = vmatpush1.bf16.msra.mxu0 %v482
          %877 = vmatprep.subr.bf16.mxu0 %v487
          %878 = vmatpush1.bf16.msra.mxu0 %v486
          %879 = vmatprep.subr.bf16.mxu0 %v491
          %880 = vmatpush1.bf16.msra.mxu0 %v490
          %881 = vmatprep.subr.bf16.mxu0 %v495
          %882 = vmatpush1.bf16.msra.mxu0 %v494
          %883 = vmatprep.subr.bf16.mxu0 %v499
          %884 = vmatpush1.bf16.msra.mxu0 %v498
          %885 = vmatprep.subr.bf16.mxu0 %v503
          %886 = vmatpush1.bf16.msra.mxu0 %v502
          %887 = vmatprep.subr.bf16.mxu0 %v507
          %888 = vmatpush1.bf16.msra.mxu0 %v506
          %889 = vmatprep.subr.bf16.mxu0 %v511
          %890 = vmatpush1.bf16.msra.mxu0 %v510
          %891 = vmatprep.mubr.bf16.mxu0 %v813
          %892 = vmatmul.mubr.bf16.gmra.mrb[0].mxu0 %v811
          %v893 = vpop.f32.mrb[0].mxu0
          %v894 = vadd.f32 %v853, %v893
          %v895 = vpop.f32.mrb[0].mxu0
          %v896 = vadd.f32 %v855, %v895
          %v897 = vpop.f32.mrb[0].mxu0
          %v898 = vpop.f32.mrb[0].mxu0
          %899 = vdwg.mxu0
          %900 = vmatprep.subr.bf16.mxu0 %v389
          %901 = vmatpush1.bf16.msra.mxu0 %v388
          %902 = vmatprep.subr.bf16.mxu0 %v393
          %903 = vmatpush1.bf16.msra.mxu0 %v392
          %904 = vmatprep.subr.bf16.mxu0 %v397
          %905 = vmatpush1.bf16.msra.mxu0 %v396
          %906 = vmatprep.subr.bf16.mxu0 %v401
          %907 = vmatpush1.bf16.msra.mxu0 %v400
          %908 = vmatprep.subr.bf16.mxu0 %v405
          %909 = vmatpush1.bf16.msra.mxu0 %v404
          %910 = vmatprep.subr.bf16.mxu0 %v409
          %911 = vmatpush1.bf16.msra.mxu0 %v408
          %912 = vmatprep.subr.bf16.mxu0 %v413
          %913 = vmatpush1.bf16.msra.mxu0 %v412
          %914 = vmatprep.subr.bf16.mxu0 %v417
          %915 = vmatpush1.bf16.msra.mxu0 %v416
          %916 = vmatprep.subr.bf16.mxu0 %v421
          %917 = vmatpush1.bf16.msra.mxu0 %v420
          %918 = vmatprep.subr.bf16.mxu0 %v425
          %919 = vmatpush1.bf16.msra.mxu0 %v424
          %920 = vmatprep.subr.bf16.mxu0 %v429
          %921 = vmatpush1.bf16.msra.mxu0 %v428
          %922 = vmatprep.subr.bf16.mxu0 %v433
          %923 = vmatpush1.bf16.msra.mxu0 %v432
          %924 = vmatprep.subr.bf16.mxu0 %v437
          %925 = vmatpush1.bf16.msra.mxu0 %v436
          %926 = vmatprep.subr.bf16.mxu0 %v441
          %927 = vmatpush1.bf16.msra.mxu0 %v440
          %928 = vmatprep.subr.bf16.mxu0 %v445
          %929 = vmatpush1.bf16.msra.mxu0 %v444
          %930 = vmatprep.subr.bf16.mxu0 %v449
          %931 = vmatpush1.bf16.msra.mxu0 %v448
          %932 = vmatprep.mubr.bf16.mxu0 %v812
          %933 = vmatmul.mubr.bf16.gmra.mrb[0].mxu0 %v804
          %v934 = vpop.f32.mrb[0].mxu0
          %v935 = vadd.f32 0.0, %v934
          %v936 = vpop.f32.mrb[0].mxu0
          %v937 = vadd.f32 0.0, %v936
          %v938 = vpop.f32.mrb[0].mxu0
          %v939 = vpop.f32.mrb[0].mxu0
          %940 = vdwg.mxu0
          %941 = vmatprep.subr.bf16.mxu0 %v453
          %942 = vmatpush1.bf16.msra.mxu0 %v452
          %943 = vmatprep.subr.bf16.mxu0 %v457
          %944 = vmatpush1.bf16.msra.mxu0 %v456
          %945 = vmatprep.subr.bf16.mxu0 %v461
          %946 = vmatpush1.bf16.msra.mxu0 %v460
          %947 = vmatprep.subr.bf16.mxu0 %v465
          %948 = vmatpush1.bf16.msra.mxu0 %v464
          %949 = vmatprep.subr.bf16.mxu0 %v469
          %950 = vmatpush1.bf16.msra.mxu0 %v468
          %951 = vmatprep.subr.bf16.mxu0 %v473
          %952 = vmatpush1.bf16.msra.mxu0 %v472
          %953 = vmatprep.subr.bf16.mxu0 %v477
          %954 = vmatpush1.bf16.msra.mxu0 %v476
          %955 = vmatprep.subr.bf16.mxu0 %v481
          %956 = vmatpush1.bf16.msra.mxu0 %v480
          %957 = vmatprep.subr.bf16.mxu0 %v485
          %958 = vmatpush1.bf16.msra.mxu0 %v484
          %959 = vmatprep.subr.bf16.mxu0 %v489
          %960 = vmatpush1.bf16.msra.mxu0 %v488
          %961 = vmatprep.subr.bf16.mxu0 %v493
          %962 = vmatpush1.bf16.msra.mxu0 %v492
          %963 = vmatprep.subr.bf16.mxu0 %v497
          %964 = vmatpush1.bf16.msra.mxu0 %v496
          %965 = vmatprep.subr.bf16.mxu0 %v501
          %966 = vmatpush1.bf16.msra.mxu0 %v500
          %967 = vmatprep.subr.bf16.mxu0 %v505
          %968 = vmatpush1.bf16.msra.mxu0 %v504
          %969 = vmatprep.subr.bf16.mxu0 %v509
          %970 = vmatpush1.bf16.msra.mxu0 %v508
          %971 = vmatprep.subr.bf16.mxu0 %v513
          %972 = vmatpush1.bf16.msra.mxu0 %v512
          %973 = vmatprep.mubr.bf16.mxu0 %v813
          %974 = vmatmul.mubr.bf16.gmra.mrb[0].mxu0 %v811
          %v975 = vpop.f32.mrb[0].mxu0
          %v976 = vadd.f32 %v935, %v975
          %v977 = vpop.f32.mrb[0].mxu0
          %v978 = vadd.f32 %v937, %v977
          %v979 = vpop.f32.mrb[0].mxu0
          %v980 = vpop.f32.mrb[0].mxu0
          %981 = vdwg.mxu0
          %v982 = vld [vmem:[%s280] sm:$0xf]
          %v984 = vlaneseq
          %v985 = vshrl.u32 %v984, 7
          %v986 = vsub.s32 0, %v985
          %v987 = vrot.slane %v982, %v986
          %v988 = vlaneseq
          %v989 = vshrl.u32 %v988, 7
          %v990 = vsub.s32 1, %v989
          %v991 = vrot.slane %v982, %v990
          %v992 = vlaneseq
          %v993 = vshrl.u32 %v992, 7
          %v994 = vsub.s32 2, %v993
          %v995 = vrot.slane %v982, %v994
          %v996 = vlaneseq
          %v997 = vshrl.u32 %v996, 7
          %v998 = vsub.s32 3, %v997
          %v999 = vrot.slane %v982, %v998
          %v1004 = vmul.f32 %v894, %v987
          %v1005 = vmul.f32 %v896, %v991
          %v1006 = vmul.f32 %v976, %v995
          %v1007 = vmul.f32 %v978, %v999
          %v1008 = vld [vmem:[%s289] sm:$0xf]
          %v1010 = vlaneseq
          %v1011 = vshrl.u32 %v1010, 7
          %v1012 = vsub.s32 0, %v1011
          %v1013 = vrot.slane %v1008, %v1012
          %v1014 = vlaneseq
          %v1015 = vshrl.u32 %v1014, 7
          %v1016 = vsub.s32 1, %v1015
          %v1017 = vrot.slane %v1008, %v1016
          %v1018 = vlaneseq
          %v1019 = vshrl.u32 %v1018, 7
          %v1020 = vsub.s32 2, %v1019
          %v1021 = vrot.slane %v1008, %v1020
          %v1022 = vlaneseq
          %v1023 = vshrl.u32 %v1022, 7
          %v1024 = vsub.s32 3, %v1023
          %v1025 = vrot.slane %v1008, %v1024
          %v1030 = vadd.f32 %v1004, %v1013
          %v1031 = vadd.f32 %v1005, %v1017
          %v1032 = vadd.f32 %v1006, %v1021
          %v1033 = vadd.f32 %v1007, %v1025
          %v1034 = vmax.f32 %v1030, 0.0
          %v1035 = vmax.f32 %v1031, 0.0
          %v1036 = vmax.f32 %v1032, 0.0
          %v1037 = vmax.f32 %v1033, 0.0
          %v1038 = vpack.c.bf16 %v1034, %v1034
          %v1039 = vpack.c.bf16 %v1035, %v1035
          %v1040 = vpack.c.bf16 %v1036, %v1036
          %v1041 = vpack.c.bf16 %v1037, %v1037
          %v1046 = vcombine.low %v1038, %v1039
          %v1047 = vcombine.low %v1040, %v1041
          %v1049 = vunpack.c.l.s4 1983009808
          %v1050 = vunpack.c.0.s8 %v1049
          %v1051 = vlaneseq
          %v1052 = vshrl.u32 %v1051, 7
          %v1053 = vsub.s32 %v1050, %v1052
          %v1054 = vrot.slane %v1046, %v1053
          %v1056 = vunpack.c.l.s4 1983009808
          %v1057 = vunpack.c.0.s8 %v1056
          %v1058 = vlaneseq
          %v1059 = vshrl.u32 %v1058, 7
          %v1060 = vsub.s32 %v1057, %v1059
          %v1061 = vrot.slane %v1047, %v1060
          %v1062 = vcombine.low %v1054, %v1061
          %s1064 = smul.u32 %s28, 4
          %s1065 = sadd.s32 %s1064, 4
          %s1066 = smul.addr %s1065, 2
          %s1067 = scalar_lea.vmem [#allocation2], %s1066
          %1068 = vst [vmem:[%s1067] sm:$0xff] %v1062
        $region60: #{tpu_custom_call.1} parent=35 // pred_fallthru
          _
        %p1069 = scmp.eq.s32.totalorder %s27, 2
        // Predicated region
        $region61: #{tpu_custom_call.1} parent=35 // pred_check
          %p1070 = pneg %p1069
        $region62: #{tpu_custom_call.1} parent=35 // pred_check_branch
          %1072 = sbr.rel (%p1070) target = $region64
        $region63: #{tpu_custom_call.1} parent=35 // pred_region
          %s1073 = scalar_lea.vmem [#allocation2], 8
          %v1074 = vld [vmem:[%s1073] sm:$0xff]
          %v1076 = vcombine.high %v1074, %v1074
          %v1078 = vunpack.c.l.s4 1983009808
          %v1079 = vunpack.c.0.s8 %v1078
          %v1080 = vlaneseq
          %v1081 = vshrl.u32 %v1080, 7
          %v1082 = vsub.s32 %v1079, %v1081
          %v1083 = vrot.slane %v1074, %v1082
          %v1085 = vunpack.c.l.s4 1983009808
          %v1086 = vunpack.c.0.s8 %v1085
          %v1087 = vlaneseq
          %v1088 = vshrl.u32 %v1087, 7
          %v1089 = vsub.s32 %v1086, %v1088
          %v1090 = vrot.slane %v1076, %v1089
          %v1091 = vcombine.high %v1083, %v1083
          %v1092 = vcombine.high %v1090, %v1090
          %1097 = vmatprep.subr.bf16.mxu0 %v387
          %1098 = vmatpush1.bf16.msra.mxu0 %v386
          %1099 = vmatprep.subr.bf16.mxu0 %v391
          %1100 = vmatpush1.bf16.msra.mxu0 %v390
          %1101 = vmatprep.subr.bf16.mxu0 %v395
          %1102 = vmatpush1.bf16.msra.mxu0 %v394
          %1103 = vmatprep.subr.bf16.mxu0 %v399
          %1104 = vmatpush1.bf16.msra.mxu0 %v398
          %1105 = vmatprep.subr.bf16.mxu0 %v403
          %1106 = vmatpush1.bf16.msra.mxu0 %v402
          %1107 = vmatprep.subr.bf16.mxu0 %v407
          %1108 = vmatpush1.bf16.msra.mxu0 %v406
          %1109 = vmatprep.subr.bf16.mxu0 %v411
          %1110 = vmatpush1.bf16.msra.mxu0 %v410
          %1111 = vmatprep.subr.bf16.mxu0 %v415
          %1112 = vmatpush1.bf16.msra.mxu0 %v414
          %1113 = vmatprep.subr.bf16.mxu0 %v419
          %1114 = vmatpush1.bf16.msra.mxu0 %v418
          %1115 = vmatprep.subr.bf16.mxu0 %v423
          %1116 = vmatpush1.bf16.msra.mxu0 %v422
          %1117 = vmatprep.subr.bf16.mxu0 %v427
          %1118 = vmatpush1.bf16.msra.mxu0 %v426
          %1119 = vmatprep.subr.bf16.mxu0 %v431
          %1120 = vmatpush1.bf16.msra.mxu0 %v430
          %1121 = vmatprep.subr.bf16.mxu0 %v435
          %1122 = vmatpush1.bf16.msra.mxu0 %v434
          %1123 = vmatprep.subr.bf16.mxu0 %v439
          %1124 = vmatpush1.bf16.msra.mxu0 %v438
          %1125 = vmatprep.subr.bf16.mxu0 %v443
          %1126 = vmatpush1.bf16.msra.mxu0 %v442
          %1127 = vmatprep.subr.bf16.mxu0 %v447
          %1128 = vmatpush1.bf16.msra.mxu0 %v446
          %1129 = vmatprep.mubr.bf16.mxu0 %v1091
          %1130 = vmatmul.mubr.bf16.gmra.mrb[0].mxu0 %v1083
          %v1131 = vpop.f32.mrb[0].mxu0
          %v1132 = vadd.f32 0.0, %v1131
          %v1133 = vpop.f32.mrb[0].mxu0
          %v1134 = vadd.f32 0.0, %v1133
          %v1135 = vpop.f32.mrb[0].mxu0
          %v1136 = vpop.f32.mrb[0].mxu0
          %1137 = vdwg.mxu0
          %1138 = vmatprep.subr.bf16.mxu0 %v451
          %1139 = vmatpush1.bf16.msra.mxu0 %v450
          %1140 = vmatprep.subr.bf16.mxu0 %v455
          %1141 = vmatpush1.bf16.msra.mxu0 %v454
          %1142 = vmatprep.subr.bf16.mxu0 %v459
          %1143 = vmatpush1.bf16.msra.mxu0 %v458
          %1144 = vmatprep.subr.bf16.mxu0 %v463
          %1145 = vmatpush1.bf16.msra.mxu0 %v462
          %1146 = vmatprep.subr.bf16.mxu0 %v467
          %1147 = vmatpush1.bf16.msra.mxu0 %v466
          %1148 = vmatprep.subr.bf16.mxu0 %v471
          %1149 = vmatpush1.bf16.msra.mxu0 %v470
          %1150 = vmatprep.subr.bf16.mxu0 %v475
          %1151 = vmatpush1.bf16.msra.mxu0 %v474
          %1152 = vmatprep.subr.bf16.mxu0 %v479
          %1153 = vmatpush1.bf16.msra.mxu0 %v478
          %1154 = vmatprep.subr.bf16.mxu0 %v483
          %1155 = vmatpush1.bf16.msra.mxu0 %v482
          %1156 = vmatprep.subr.bf16.mxu0 %v487
          %1157 = vmatpush1.bf16.msra.mxu0 %v486
          %1158 = vmatprep.subr.bf16.mxu0 %v491
          %1159 = vmatpush1.bf16.msra.mxu0 %v490
          %1160 = vmatprep.subr.bf16.mxu0 %v495
          %1161 = vmatpush1.bf16.msra.mxu0 %v494
          %1162 = vmatprep.subr.bf16.mxu0 %v499
          %1163 = vmatpush1.bf16.msra.mxu0 %v498
          %1164 = vmatprep.subr.bf16.mxu0 %v503
          %1165 = vmatpush1.bf16.msra.mxu0 %v502
          %1166 = vmatprep.subr.bf16.mxu0 %v507
          %1167 = vmatpush1.bf16.msra.mxu0 %v506
          %1168 = vmatprep.subr.bf16.mxu0 %v511
          %1169 = vmatpush1.bf16.msra.mxu0 %v510
          %1170 = vmatprep.mubr.bf16.mxu0 %v1092
          %1171 = vmatmul.mubr.bf16.gmra.mrb[0].mxu0 %v1090
          %v1172 = vpop.f32.mrb[0].mxu0
          %v1173 = vadd.f32 %v1132, %v1172
          %v1174 = vpop.f32.mrb[0].mxu0
          %v1175 = vadd.f32 %v1134, %v1174
          %v1176 = vpop.f32.mrb[0].mxu0
          %v1177 = vpop.f32.mrb[0].mxu0
          %1178 = vdwg.mxu0
          %1179 = vmatprep.subr.bf16.mxu0 %v389
          %1180 = vmatpush1.bf16.msra.mxu0 %v388
          %1181 = vmatprep.subr.bf16.mxu0 %v393
          %1182 = vmatpush1.bf16.msra.mxu0 %v392
          %1183 = vmatprep.subr.bf16.mxu0 %v397
          %1184 = vmatpush1.bf16.msra.mxu0 %v396
          %1185 = vmatprep.subr.bf16.mxu0 %v401
          %1186 = vmatpush1.bf16.msra.mxu0 %v400
          %1187 = vmatprep.subr.bf16.mxu0 %v405
          %1188 = vmatpush1.bf16.msra.mxu0 %v404
          %1189 = vmatprep.subr.bf16.mxu0 %v409
          %1190 = vmatpush1.bf16.msra.mxu0 %v408
          %1191 = vmatprep.subr.bf16.mxu0 %v413
          %1192 = vmatpush1.bf16.msra.mxu0 %v412
          %1193 = vmatprep.subr.bf16.mxu0 %v417
          %1194 = vmatpush1.bf16.msra.mxu0 %v416
          %1195 = vmatprep.subr.bf16.mxu0 %v421
          %1196 = vmatpush1.bf16.msra.mxu0 %v420
          %1197 = vmatprep.subr.bf16.mxu0 %v425
          %1198 = vmatpush1.bf16.msra.mxu0 %v424
          %1199 = vmatprep.subr.bf16.mxu0 %v429
          %1200 = vmatpush1.bf16.msra.mxu0 %v428
          %1201 = vmatprep.subr.bf16.mxu0 %v433
          %1202 = vmatpush1.bf16.msra.mxu0 %v432
          %1203 = vmatprep.subr.bf16.mxu0 %v437
          %1204 = vmatpush1.bf16.msra.mxu0 %v436
          %1205 = vmatprep.subr.bf16.mxu0 %v441
          %1206 = vmatpush1.bf16.msra.mxu0 %v440
          %1207 = vmatprep.subr.bf16.mxu0 %v445
          %1208 = vmatpush1.bf16.msra.mxu0 %v444
          %1209 = vmatprep.subr.bf16.mxu0 %v449
          %1210 = vmatpush1.bf16.msra.mxu0 %v448
          %1211 = vmatprep.mubr.bf16.mxu0 %v1091
          %1212 = vmatmul.mubr.bf16.gmra.mrb[0].mxu0 %v1083
          %v1213 = vpop.f32.mrb[0].mxu0
          %v1214 = vadd.f32 0.0, %v1213
          %v1215 = vpop.f32.mrb[0].mxu0
          %v1216 = vadd.f32 0.0, %v1215
          %v1217 = vpop.f32.mrb[0].mxu0
          %v1218 = vpop.f32.mrb[0].mxu0
          %1219 = vdwg.mxu0
          %1220 = vmatprep.subr.bf16.mxu0 %v453
          %1221 = vmatpush1.bf16.msra.mxu0 %v452
          %1222 = vmatprep.subr.bf16.mxu0 %v457
          %1223 = vmatpush1.bf16.msra.mxu0 %v456
          %1224 = vmatprep.subr.bf16.mxu0 %v461
          %1225 = vmatpush1.bf16.msra.mxu0 %v460
          %1226 = vmatprep.subr.bf16.mxu0 %v465
          %1227 = vmatpush1.bf16.msra.mxu0 %v464
          %1228 = vmatprep.subr.bf16.mxu0 %v469
          %1229 = vmatpush1.bf16.msra.mxu0 %v468
          %1230 = vmatprep.subr.bf16.mxu0 %v473
          %1231 = vmatpush1.bf16.msra.mxu0 %v472
          %1232 = vmatprep.subr.bf16.mxu0 %v477
          %1233 = vmatpush1.bf16.msra.mxu0 %v476
          %1234 = vmatprep.subr.bf16.mxu0 %v481
          %1235 = vmatpush1.bf16.msra.mxu0 %v480
          %1236 = vmatprep.subr.bf16.mxu0 %v485
          %1237 = vmatpush1.bf16.msra.mxu0 %v484
          %1238 = vmatprep.subr.bf16.mxu0 %v489
          %1239 = vmatpush1.bf16.msra.mxu0 %v488
          %1240 = vmatprep.subr.bf16.mxu0 %v493
          %1241 = vmatpush1.bf16.msra.mxu0 %v492
          %1242 = vmatprep.subr.bf16.mxu0 %v497
          %1243 = vmatpush1.bf16.msra.mxu0 %v496
          %1244 = vmatprep.subr.bf16.mxu0 %v501
          %1245 = vmatpush1.bf16.msra.mxu0 %v500
          %1246 = vmatprep.subr.bf16.mxu0 %v505
          %1247 = vmatpush1.bf16.msra.mxu0 %v504
          %1248 = vmatprep.subr.bf16.mxu0 %v509
          %1249 = vmatpush1.bf16.msra.mxu0 %v508
          %1250 = vmatprep.subr.bf16.mxu0 %v513
          %1251 = vmatpush1.bf16.msra.mxu0 %v512
          %1252 = vmatprep.mubr.bf16.mxu0 %v1092
          %1253 = vmatmul.mubr.bf16.gmra.mrb[0].mxu0 %v1090
          %v1254 = vpop.f32.mrb[0].mxu0
          %v1255 = vadd.f32 %v1214, %v1254
          %v1256 = vpop.f32.mrb[0].mxu0
          %v1257 = vadd.f32 %v1216, %v1256
          %v1258 = vpop.f32.mrb[0].mxu0
          %v1259 = vpop.f32.mrb[0].mxu0
          %1260 = vdwg.mxu0
          %v1261 = vld [vmem:[%s280] sm:$0xf]
          %v1263 = vlaneseq
          %v1264 = vshrl.u32 %v1263, 7
          %v1265 = vsub.s32 0, %v1264
          %v1266 = vrot.slane %v1261, %v1265
          %v1267 = vlaneseq
          %v1268 = vshrl.u32 %v1267, 7
          %v1269 = vsub.s32 1, %v1268
          %v1270 = vrot.slane %v1261, %v1269
          %v1271 = vlaneseq
          %v1272 = vshrl.u32 %v1271, 7
          %v1273 = vsub.s32 2, %v1272
          %v1274 = vrot.slane %v1261, %v1273
          %v1275 = vlaneseq
          %v1276 = vshrl.u32 %v1275, 7
          %v1277 = vsub.s32 3, %v1276
          %v1278 = vrot.slane %v1261, %v1277
          %v1283 = vmul.f32 %v1173, %v1266
          %v1284 = vmul.f32 %v1175, %v1270
          %v1285 = vmul.f32 %v1255, %v1274
          %v1286 = vmul.f32 %v1257, %v1278
          %v1287 = vld [vmem:[%s289] sm:$0xf]
          %v1289 = vlaneseq
          %v1290 = vshrl.u32 %v1289, 7
          %v1291 = vsub.s32 0, %v1290
          %v1292 = vrot.slane %v1287, %v1291
          %v1293 = vlaneseq
          %v1294 = vshrl.u32 %v1293, 7
          %v1295 = vsub.s32 1, %v1294
          %v1296 = vrot.slane %v1287, %v1295
          %v1297 = vlaneseq
          %v1298 = vshrl.u32 %v1297, 7
          %v1299 = vsub.s32 2, %v1298
          %v1300 = vrot.slane %v1287, %v1299
          %v1301 = vlaneseq
          %v1302 = vshrl.u32 %v1301, 7
          %v1303 = vsub.s32 3, %v1302
          %v1304 = vrot.slane %v1287, %v1303
          %v1309 = vadd.f32 %v1283, %v1292
          %v1310 = vadd.f32 %v1284, %v1296
          %v1311 = vadd.f32 %v1285, %v1300
          %v1312 = vadd.f32 %v1286, %v1304
          %v1313 = vmax.f32 %v1309, 0.0
          %v1314 = vmax.f32 %v1310, 0.0
          %v1315 = vmax.f32 %v1311, 0.0
          %v1316 = vmax.f32 %v1312, 0.0
          %v1321 = vcombine.low %v1313, %v1314
          %v1322 = vcombine.low %v1315, %v1316
          %1325 = vst [vmem:[#allocation11] sm:$0xff] %v1321
          %1326 = vst [vmem:[#allocation11 + $0x8] sm:$0xff] %v1322
        $region64: #{tpu_custom_call.1} parent=35 // pred_fallthru
          _
        // Predicated region
        $region65: #{tpu_custom_call.1} parent=35 // pred_check
          %p1327 = pneg %p158
        $region66: #{tpu_custom_call.1} parent=35 // pred_check_branch
          %1329 = sbr.rel (%p1327) target = $region68
        $region67: #{tpu_custom_call.1} parent=35 // pred_region
          %s1330 = smul.u32 4, %s28
          %s1332 = ssub.s32 256, 256
          %1333 = vsyncadd [#allocation5], %s1332
          %s1334 = smul.addr %s1330, 64
          %s1335 = scalar_lea.hbm %s4, %s1334
          %s1337 = sshll.u32 [#allocation11], 4
          %s1338 = int_to_ptr.vmem [resolvable:$true] %s1337
          %1340 = dma.vmem_to_hbm [thread:$0]  %s1338, 256, %s1335, [#allocation5]
        $region68: #{tpu_custom_call.1} parent=35 // pred_fallthru
          _
        // Predicated region
        $region69: #{tpu_custom_call.1} parent=35 // pred_check
          %p1341 = pneg %p158
        $region70: #{tpu_custom_call.1} parent=35 // pred_check_branch
          %1343 = sbr.rel (%p1341) target = $region72
        $region71: #{tpu_custom_call.1} parent=35 // pred_region
          %1344 = dma.done [#allocation5], 256
        $region72: #{tpu_custom_call.1} parent=35 // pred_fallthru
          _
      $region36: #{tpu_custom_call.1} parent=5 // pred_fallthru
        _
      %p1345 = scmp.le.s32.totalorder 2, %s18
      // Predicated region
      $region73: #{tpu_custom_call.1} parent=5 // pred_check
        %p1346 = pneg %p1345
      $region74: #{tpu_custom_call.1} parent=5 // pred_check_branch
        %1348 = sbr.rel (%p1346) target = $region76
      $region75: #{tpu_custom_call.1} parent=5 // pred_region
        %s1349 = ssub.s32 %s18, 2
      $region76: #{tpu_custom_call.1} parent=5 // pred_fallthru
        _
    $region6: #{tpu_custom_call.1} parent=1 // loop_footer
      %s22 = sadd.s32 1, %s18
    $region7: #{tpu_custom_call.1} parent=1 // loop_footer_branch
      %17 = sbr.rel target = $region3
    $region8: #{tpu_custom_call.1} parent=1 // loop_exit
      _
    %1350 = vsyncpa [#allocation4], 1
    %s1351 = scalar_lea.sflag [#allocation4], 1
    %1352 = vsyncpa %s1351, 1
    %1353 = vsyncpa [#allocation7], 1
    %s1354 = scalar_lea.sflag [#allocation7], 1
    %1355 = vsyncpa %s1354, 1
    %1356 = vsyncpa [#allocation10], 1
    %s1357 = scalar_lea.sflag [#allocation10], 1
    %1358 = vsyncpa %s1357, 1
    %1359 = vsyncpa [#allocation5], 1
    %s1360 = scalar_lea.sflag [#allocation5], 1
    %1361 = vsyncpa %s1360, 1

</llo_original>
